<compile_context>
chip_gen: v6e
topology: v6e:2x2x1
jax: 0.10.0
libtpu: 0.0.40
codegen_flags: <defaults>
</compile_context>

<pallas_src>
import functools

import jax
import jax.numpy as jnp
from jax import lax
from jax.experimental import pallas as pl
from jax.experimental.pallas import tpu as pltpu


# ----------------------------------------------------------------------------
# Fused kernel: QKV proj + multi-head attention + out-proj + residual + LayerNorm
# ----------------------------------------------------------------------------

def _cross_attn_layer_kernel(*refs, nhead, eps, has_qpos, has_kpos):
    f32 = jnp.float32
    i = 0
    tgt_ref = refs[i]; i += 1
    qpos_ref = None
    if has_qpos:
        qpos_ref = refs[i]; i += 1
    mem_ref = refs[i]; i += 1
    kpos_ref = None
    if has_kpos:
        kpos_ref = refs[i]; i += 1
    wqkv_ref, bqkv_ref, wo_ref, bo_ref, gamma_ref, beta_ref, o_ref = refs[i:]

    D = o_ref.shape[-1]
    Dh = D // nhead
    scale = 1.0 / float(Dh) ** 0.5
    act_dtype = tgt_ref.dtype

    def mm_t(x, w):
        # x @ w.T with w kept in PyTorch (out, in) layout: contract dim 1 of both.
        return lax.dot_general(x, w, (((1,), (1,)), ((), ())),
                               preferred_element_type=f32)

    tgt = tgt_ref[0]                                          # (tT, D)
    q_in = tgt if qpos_ref is None else tgt + qpos_ref[0]     # query + query_pos
    mem = mem_ref[0]                                          # (S, D)  value
    k_in = mem if kpos_ref is None else mem + kpos_ref[0]     # key + pos

    # Per-head attention. Per-head weights are leading-axis views (no lane/sublane
    # slicing); each projection keeps full contraction depth K = D.
    heads = []
    for h in range(nhead):
        q_h = ((mm_t(q_in, wqkv_ref[0, h]) + bqkv_ref[0, h]) * scale).astype(act_dtype)
        k_h = (mm_t(k_in, wqkv_ref[1, h]) + bqkv_ref[1, h]).astype(act_dtype)
        v_h = (mm_t(mem, wqkv_ref[2, h]) + bqkv_ref[2, h]).astype(act_dtype)

        s = mm_t(q_h, k_h)                                    # (tT, S) f32 scores
        m = jnp.max(s, axis=-1, keepdims=True)
        p = jnp.exp(s - m)
        denom = jnp.sum(p, axis=-1, keepdims=True)
        # Exact softmax normalization (review correctness concern); divide the
        # (tT, Dh) head output instead of the (tT, S) probabilities (fewer divides).
        head = jnp.dot(p.astype(act_dtype), v_h,
                       preferred_element_type=f32) / denom    # (tT, Dh)
        heads.append(head.astype(act_dtype))

    # Single out-projection with full contraction depth K = D (un-folded).
    concat = jnp.concatenate(heads, axis=-1)                  # (tT, D)
    attn = mm_t(concat, wo_ref[...]) + bo_ref[...]            # (tT, D) f32

    # Residual (dropout = identity in eval) + LayerNorm over the feature dim (f32).
    x = tgt.astype(f32) + attn
    mu = jnp.mean(x, axis=-1, keepdims=True)
    xc = x - mu
    var = jnp.mean(xc * xc, axis=-1, keepdims=True)
    y = xc * lax.rsqrt(var + eps)
    y = y * gamma_ref[...] + beta_ref[...]
    o_ref[0] = y.astype(o_ref.dtype)


# ----------------------------------------------------------------------------
# Wrapper
# ----------------------------------------------------------------------------

def _pick_seq_block(n, target=128):
    """Largest multiple-of-8 divisor of n that is <= target (or n itself)."""
    if n <= target:
        return n
    for cand in range(target, 7, -8):
        if n % cand == 0:
            return cand
    return n


def cross_attention_layer_forward(params, tgt, memory, memory_mask=None,
                                  memory_key_padding_mask=None,
                                  pos=None, query_pos=None, *,
                                  nhead, eps=1e-5, compute_dtype=None):
    """CrossAttentionLayer.forward_post. tgt: (T, B, D), memory: (S, B, D) -> (T, B, D).

    compute_dtype: optional dtype (e.g. jnp.bfloat16) to cast activations/weights
    once host-side for bf16-native MXU matmuls; None keeps the input dtype.
    """
    # TODO(synk): attention masks not implemented (module exercised with None).
    assert memory_mask is None and memory_key_padding_mask is None
    T, B, D = tgt.shape
    S = memory.shape[0]
    assert D % nhead == 0
    Dh = D // nhead
    out_dtype = tgt.dtype
    has_qpos = query_pos is not None
    has_kpos = pos is not None

    def cast(x):
        return x if compute_dtype is None else x.astype(compute_dtype)

    # Batch-major layout so each grid step owns a contiguous (tT, D) slab; full-extent
    # trailing (L, D) blocks keep the (8,128) rule trivially satisfied.
    tgt_b = cast(jnp.transpose(tgt, (1, 0, 2)))         # (B, T, D)
    mem_b = cast(jnp.transpose(memory, (1, 0, 2)))      # (B, S, D)

    # Pre-split weights host-side (free views): the kernel only leading-axis-indexes.
    w_qkv = cast(params["in_proj_weight"].reshape(3, nhead, Dh, D))
    b_qkv = cast(params["in_proj_bias"].reshape(3, nhead, 1, Dh))
    w_o = cast(params["out_proj_weight"])                         # (D, D) (out, in)
    b_o = cast(params["out_proj_bias"].reshape(1, D))
    gamma = params["ln_gamma"].reshape(1, D).astype(jnp.float32)
    beta = params["ln_beta"].reshape(1, D).astype(jnp.float32)

    tT = _pick_seq_block(T)
    grid = (B, T // tT)

    inputs = [tgt_b]
    in_specs = [pl.BlockSpec((1, tT, D), lambda b, t: (b, t, 0))]
    if has_qpos:
        inputs.append(cast(jnp.transpose(query_pos, (1, 0, 2))))
        in_specs.append(pl.BlockSpec((1, tT, D), lambda b, t: (b, t, 0)))
    inputs.append(mem_b)
    in_specs.append(pl.BlockSpec((1, S, D), lambda b, t: (b, 0, 0)))
    if has_kpos:
        inputs.append(cast(jnp.transpose(pos, (1, 0, 2))))
        in_specs.append(pl.BlockSpec((1, S, D), lambda b, t: (b, 0, 0)))
    inputs += [w_qkv, b_qkv, w_o, b_o, gamma, beta]
    in_specs += [
        pl.BlockSpec((3, nhead, Dh, D), lambda b, t: (0, 0, 0, 0)),  # qkv weights
        pl.BlockSpec((3, nhead, 1, Dh), lambda b, t: (0, 0, 0, 0)),  # qkv biases
        pl.BlockSpec((D, D), lambda b, t: (0, 0)),                   # out_proj weight
        pl.BlockSpec((1, D), lambda b, t: (0, 0)),                   # out_proj bias
        pl.BlockSpec((1, D), lambda b, t: (0, 0)),                   # ln gamma
        pl.BlockSpec((1, D), lambda b, t: (0, 0)),                   # ln beta
    ]

    kernel = functools.partial(_cross_attn_layer_kernel, nhead=nhead, eps=eps,
                               has_qpos=has_qpos, has_kpos=has_kpos)

    out_b = pl.pallas_call(
        kernel,
        out_shape=jax.ShapeDtypeStruct((B, T, D), out_dtype),
        grid=grid,
        in_specs=in_specs,
        out_specs=pl.BlockSpec((1, tT, D), lambda b, t: (b, t, 0)),
        compiler_params=pltpu.CompilerParams(
            dimension_semantics=("parallel", "parallel"),   # batch x T-tiles (v7x 2 TCs)
            vmem_limit_bytes=32 * 1024 * 1024),
    )(*inputs)

    return jnp.transpose(out_b, (1, 0, 2))                  # back to (T, B, D)


# ----------------------------------------------------------------------------
# Pure-JAX reference (for a loose self-check), params init, demo run
# ----------------------------------------------------------------------------

def _reference_forward(params, tgt, memory, pos=None, query_pos=None, *, nhead, eps=1e-5):
    T, B, D = tgt.shape
    S = memory.shape[0]
    Dh = D // nhead
    w, b = params["in_proj_weight"], params["in_proj_bias"]
    q_in = tgt if query_pos is None else tgt + query_pos
    k_in = memory if pos is None else memory + pos
    q = (q_in @ w[:D].T + b[:D]) * (1.0 / Dh ** 0.5)
    k = k_in @ w[D:2 * D].T + b[D:2 * D]
    v = memory @ w[2 * D:].T + b[2 * D:]

    def split(x, L):
        return x.reshape(L, B, nhead, Dh).transpose(1, 2, 0, 3)   # (B, h, L, Dh)

    qh, kh, vh = split(q, T), split(k, S), split(v, S)
    s = jnp.einsum('bhtd,bhsd->bhts', qh, kh)
    p = jax.nn.softmax(s, axis=-1)
    o = jnp.einsum('bhts,bhsd->bhtd', p, vh)
    o = o.transpose(2, 0, 1, 3).reshape(T, B, D)
    attn = o @ params["out_proj_weight"].T + params["out_proj_bias"]
    x = tgt + attn
    mu = x.mean(-1, keepdims=True)
    var = ((x - mu) ** 2).mean(-1, keepdims=True)
    y = (x - mu) / jnp.sqrt(var + eps)
    return y * params["ln_gamma"] + params["ln_beta"]


def init_params(key, d_model):
    ks = jax.random.split(key, 6)
    lim = (6.0 / (2 * d_model)) ** 0.5  # xavier-uniform-ish
    return {
        "in_proj_weight": jax.random.uniform(ks[0], (3 * d_model, d_model),
                                             jnp.float32, -lim, lim),
        "in_proj_bias": 0.02 * jax.random.normal(ks[1], (3 * d_model,), jnp.float32),
        "out_proj_weight": jax.random.uniform(ks[2], (d_model, d_model),
                                              jnp.float32, -lim, lim),
        "out_proj_bias": 0.02 * jax.random.normal(ks[3], (d_model,), jnp.float32),
        "ln_gamma": 1.0 + 0.05 * jax.random.normal(ks[4], (d_model,), jnp.float32),
        "ln_beta": 0.02 * jax.random.normal(ks[5], (d_model,), jnp.float32),
    }


if __name__ == "__main__":
    d_model, nhead = 32, 4
    B, T, S = 2, 8, 12

    key = jax.random.PRNGKey(0)
    k_params, k_tgt, k_mem, k_qp, k_p = jax.random.split(key, 5)
    params = init_params(k_params, d_model)

    tgt = jax.random.normal(k_tgt, (T, B, d_model), jnp.float32)
    memory = jax.random.normal(k_mem, (S, B, d_model), jnp.float32)
    query_pos = 0.1 * jax.random.normal(k_qp, (T, B, d_model), jnp.float32)
    pos = 0.1 * jax.random.normal(k_p, (S, B, d_model), jnp.float32)

    fwd = jax.jit(functools.partial(cross_attention_layer_forward, nhead=nhead))
    out = fwd(params, tgt, memory, pos=pos, query_pos=query_pos)
    jax.block_until_ready(out)

    assert out.shape == (T, B, d_model)
    assert jnp.all(jnp.isfinite(out))

    # Loose sanity check against a pure-JAX reference (tolerant of matmul precision).
    ref = _reference_forward(params, tgt, memory, pos=pos, query_pos=query_pos,
                             nhead=nhead)
    assert jnp.allclose(out, ref, atol=5e-2, rtol=5e-2)

    print("KERNEL_OK")
</pallas_src>

<mosaic_0001>
module attributes {stable_mosaic.version = 11 : i64} {
  func.func @_cross_attn_layer_kernel(%arg0: i32, %arg1: i32, %arg2: memref<1x8x32xf32, #tpu.memory_space<vmem>>, %arg3: memref<1x8x32xf32, #tpu.memory_space<vmem>>, %arg4: memref<1x12x32xf32, #tpu.memory_space<vmem>>, %arg5: memref<1x12x32xf32, #tpu.memory_space<vmem>>, %arg6: memref<3x4x8x32xf32, #tpu.memory_space<vmem>>, %arg7: memref<3x4x1x8xf32, #tpu.memory_space<vmem>>, %arg8: memref<32x32xf32, #tpu.memory_space<vmem>>, %arg9: memref<1x32xf32, #tpu.memory_space<vmem>>, %arg10: memref<1x32xf32, #tpu.memory_space<vmem>>, %arg11: memref<1x32xf32, #tpu.memory_space<vmem>>, %arg12: memref<1x8x32xf32, #tpu.memory_space<vmem>>) attributes {dimension_semantics = [#tpu.dimension_semantics<parallel>, #tpu.dimension_semantics<parallel>], iteration_bounds = array<i64: 2, 1>, scalar_prefetch = 0 : i64, scratch_operands = 0 : i64, tpu.core_type = #tpu.core_type<tc>, window_params = [{transform_indices = @transform_0, window_bounds = array<i64: 1, 8, 32>}, {transform_indices = @transform_1, window_bounds = array<i64: 1, 8, 32>}, {transform_indices = @transform_2, window_bounds = array<i64: 1, 12, 32>}, {transform_indices = @transform_3, window_bounds = array<i64: 1, 12, 32>}, {pipeline_mode = #tpu.pipeline_mode<synchronous>, transform_indices = @transform_4, window_bounds = array<i64: 3, 4, 8, 32>}, {pipeline_mode = #tpu.pipeline_mode<synchronous>, transform_indices = @transform_5, window_bounds = array<i64: 3, 4, 1, 8>}, {pipeline_mode = #tpu.pipeline_mode<synchronous>, transform_indices = @transform_6, window_bounds = array<i64: 32, 32>}, {pipeline_mode = #tpu.pipeline_mode<synchronous>, transform_indices = @transform_7, window_bounds = array<i64: 1, 32>}, {pipeline_mode = #tpu.pipeline_mode<synchronous>, transform_indices = @transform_8, window_bounds = array<i64: 1, 32>}, {pipeline_mode = #tpu.pipeline_mode<synchronous>, transform_indices = @transform_9, window_bounds = array<i64: 1, 32>}, {transform_indices = @transform_10, window_bounds = array<i64: 1, 8, 32>}]} {
    %c0 = arith.constant 0 : index
    %c0_0 = arith.constant 0 : index
    %c0_1 = arith.constant 0 : index
    %0 = vector.load %arg2[%c0, %c0_0, %c0_1] : memref<1x8x32xf32, #tpu.memory_space<vmem>>, vector<1x8x32xf32>
    %1 = vector.shape_cast %0 : vector<1x8x32xf32> to vector<8x32xf32>
    %c0_2 = arith.constant 0 : index
    %c0_3 = arith.constant 0 : index
    %c0_4 = arith.constant 0 : index
    %2 = vector.load %arg3[%c0_2, %c0_3, %c0_4] : memref<1x8x32xf32, #tpu.memory_space<vmem>>, vector<1x8x32xf32>
    %3 = vector.shape_cast %2 : vector<1x8x32xf32> to vector<8x32xf32>
    %4 = arith.addf %1, %3 : vector<8x32xf32>
    %c0_5 = arith.constant 0 : index
    %c0_6 = arith.constant 0 : index
    %c0_7 = arith.constant 0 : index
    %5 = vector.load %arg4[%c0_5, %c0_6, %c0_7] : memref<1x12x32xf32, #tpu.memory_space<vmem>>, vector<1x12x32xf32>
    %6 = vector.shape_cast %5 : vector<1x12x32xf32> to vector<12x32xf32>
    %c0_8 = arith.constant 0 : index
    %c0_9 = arith.constant 0 : index
    %c0_10 = arith.constant 0 : index
    %7 = vector.load %arg5[%c0_8, %c0_9, %c0_10] : memref<1x12x32xf32, #tpu.memory_space<vmem>>, vector<1x12x32xf32>
    %8 = vector.shape_cast %7 : vector<1x12x32xf32> to vector<12x32xf32>
    %9 = arith.addf %6, %8 : vector<12x32xf32>
    %c0_11 = arith.constant 0 : index
    %c0_12 = arith.constant 0 : index
    %c0_13 = arith.constant 0 : index
    %c0_14 = arith.constant 0 : index
    %10 = vector.load %arg6[%c0_11, %c0_12, %c0_13, %c0_14] : memref<3x4x8x32xf32, #tpu.memory_space<vmem>>, vector<1x1x8x32xf32>
    %11 = vector.shape_cast %10 : vector<1x1x8x32xf32> to vector<8x32xf32>
    %cst = arith.constant dense<0.000000e+00> : vector<8x8xf32>
    %12 = tpu.matmul %4, %11, %cst {dimension_numbers = #tpu.dot_dimension_numbers<[1], [1], [0], [0], [0, 0, 1, 0], [], []>} : vector<8x32xf32>, vector<8x32xf32>, vector<8x8xf32> -> vector<8x8xf32>
    %c0_15 = arith.constant 0 : index
    %c0_16 = arith.constant 0 : index
    %c0_17 = arith.constant 0 : index
    %c0_18 = arith.constant 0 : index
    %13 = vector.load %arg7[%c0_15, %c0_16, %c0_17, %c0_18] : memref<3x4x1x8xf32, #tpu.memory_space<vmem>>, vector<1x1x1x8xf32>
    %14 = vector.shape_cast %13 : vector<1x1x1x8xf32> to vector<1x8xf32>
    %15 = vector.broadcast %14 : vector<1x8xf32> to vector<8x8xf32>
    %16 = arith.addf %12, %15 : vector<8x8xf32>
    %cst_19 = arith.constant 0.353553385 : f32
    %17 = vector.broadcast %cst_19 : f32 to vector<8x8xf32>
    %18 = arith.mulf %16, %17 : vector<8x8xf32>
    %c1 = arith.constant 1 : index
    %c0_20 = arith.constant 0 : index
    %c0_21 = arith.constant 0 : index
    %c0_22 = arith.constant 0 : index
    %19 = vector.load %arg6[%c1, %c0_20, %c0_21, %c0_22] : memref<3x4x8x32xf32, #tpu.memory_space<vmem>>, vector<1x1x8x32xf32>
    %20 = vector.shape_cast %19 : vector<1x1x8x32xf32> to vector<8x32xf32>
    %cst_23 = arith.constant dense<0.000000e+00> : vector<12x8xf32>
    %21 = tpu.matmul %9, %20, %cst_23 {dimension_numbers = #tpu.dot_dimension_numbers<[1], [1], [0], [0], [0, 0, 1, 0], [], []>} : vector<12x32xf32>, vector<8x32xf32>, vector<12x8xf32> -> vector<12x8xf32>
    %c1_24 = arith.constant 1 : index
    %c0_25 = arith.constant 0 : index
    %c0_26 = arith.constant 0 : index
    %c0_27 = arith.constant 0 : index
    %22 = vector.load %arg7[%c1_24, %c0_25, %c0_26, %c0_27] : memref<3x4x1x8xf32, #tpu.memory_space<vmem>>, vector<1x1x1x8xf32>
    %23 = vector.shape_cast %22 : vector<1x1x1x8xf32> to vector<1x8xf32>
    %24 = vector.broadcast %23 : vector<1x8xf32> to vector<12x8xf32>
    %25 = arith.addf %21, %24 : vector<12x8xf32>
    %c2 = arith.constant 2 : index
    %c0_28 = arith.constant 0 : index
    %c0_29 = arith.constant 0 : index
    %c0_30 = arith.constant 0 : index
    %26 = vector.load %arg6[%c2, %c0_28, %c0_29, %c0_30] : memref<3x4x8x32xf32, #tpu.memory_space<vmem>>, vector<1x1x8x32xf32>
    %27 = vector.shape_cast %26 : vector<1x1x8x32xf32> to vector<8x32xf32>
    %cst_31 = arith.constant dense<0.000000e+00> : vector<12x8xf32>
    %28 = tpu.matmul %6, %27, %cst_31 {dimension_numbers = #tpu.dot_dimension_numbers<[1], [1], [0], [0], [0, 0, 1, 0], [], []>} : vector<12x32xf32>, vector<8x32xf32>, vector<12x8xf32> -> vector<12x8xf32>
    %c2_32 = arith.constant 2 : index
    %c0_33 = arith.constant 0 : index
    %c0_34 = arith.constant 0 : index
    %c0_35 = arith.constant 0 : index
    %29 = vector.load %arg7[%c2_32, %c0_33, %c0_34, %c0_35] : memref<3x4x1x8xf32, #tpu.memory_space<vmem>>, vector<1x1x1x8xf32>
    %30 = vector.shape_cast %29 : vector<1x1x1x8xf32> to vector<1x8xf32>
    %31 = vector.broadcast %30 : vector<1x8xf32> to vector<12x8xf32>
    %32 = arith.addf %28, %31 : vector<12x8xf32>
    %cst_36 = arith.constant dense<0.000000e+00> : vector<8x12xf32>
    %33 = tpu.matmul %18, %25, %cst_36 {dimension_numbers = #tpu.dot_dimension_numbers<[1], [1], [0], [0], [0, 0, 1, 0], [], []>} : vector<8x8xf32>, vector<12x8xf32>, vector<8x12xf32> -> vector<8x12xf32>
    %cst_37 = arith.constant dense<0xFF800000> : vector<8xf32>
    %34 = vector.multi_reduction <maximumf>, %33, %cst_37 [1] : vector<8x12xf32> to vector<8xf32>
    %35 = vector.shape_cast %34 : vector<8xf32> to vector<8x1xf32>
    %36 = vector.broadcast %35 : vector<8x1xf32> to vector<8x12xf32>
    %37 = arith.subf %33, %36 : vector<8x12xf32>
    %38 = math.exp %37 : vector<8x12xf32>
    %cst_38 = arith.constant dense<0.000000e+00> : vector<8xf32>
    %39 = vector.multi_reduction <add>, %38, %cst_38 [1] : vector<8x12xf32> to vector<8xf32>
    %40 = vector.shape_cast %39 : vector<8xf32> to vector<8x1xf32>
    %cst_39 = arith.constant dense<0.000000e+00> : vector<8x8xf32>
    %41 = tpu.matmul %38, %32, %cst_39 {dimension_numbers = #tpu.dot_dimension_numbers<[1], [0], [0], [1], [0, 0, 1, 1], [], []>} : vector<8x12xf32>, vector<12x8xf32>, vector<8x8xf32> -> vector<8x8xf32>
    %42 = vector.broadcast %40 : vector<8x1xf32> to vector<8x8xf32>
    %43 = arith.divf %41, %42 : vector<8x8xf32>
    %c0_40 = arith.constant 0 : index
    %c1_41 = arith.constant 1 : index
    %c0_42 = arith.constant 0 : index
    %c0_43 = arith.constant 0 : index
    %44 = vector.load %arg6[%c0_40, %c1_41, %c0_42, %c0_43] : memref<3x4x8x32xf32, #tpu.memory_space<vmem>>, vector<1x1x8x32xf32>
    %45 = vector.shape_cast %44 : vector<1x1x8x32xf32> to vector<8x32xf32>
    %cst_44 = arith.constant dense<0.000000e+00> : vector<8x8xf32>
    %46 = tpu.matmul %4, %45, %cst_44 {dimension_numbers = #tpu.dot_dimension_numbers<[1], [1], [0], [0], [0, 0, 1, 0], [], []>} : vector<8x32xf32>, vector<8x32xf32>, vector<8x8xf32> -> vector<8x8xf32>
    %c0_45 = arith.constant 0 : index
    %c1_46 = arith.constant 1 : index
    %c0_47 = arith.constant 0 : index
    %c0_48 = arith.constant 0 : index
    %47 = vector.load %arg7[%c0_45, %c1_46, %c0_47, %c0_48] : memref<3x4x1x8xf32, #tpu.memory_space<vmem>>, vector<1x1x1x8xf32>
    %48 = vector.shape_cast %47 : vector<1x1x1x8xf32> to vector<1x8xf32>
    %49 = vector.broadcast %48 : vector<1x8xf32> to vector<8x8xf32>
    %50 = arith.addf %46, %49 : vector<8x8xf32>
    %cst_49 = arith.constant 0.353553385 : f32
    %51 = vector.broadcast %cst_49 : f32 to vector<8x8xf32>
    %52 = arith.mulf %50, %51 : vector<8x8xf32>
    %c1_50 = arith.constant 1 : index
    %c1_51 = arith.constant 1 : index
    %c0_52 = arith.constant 0 : index
    %c0_53 = arith.constant 0 : index
    %53 = vector.load %arg6[%c1_50, %c1_51, %c0_52, %c0_53] : memref<3x4x8x32xf32, #tpu.memory_space<vmem>>, vector<1x1x8x32xf32>
    %54 = vector.shape_cast %53 : vector<1x1x8x32xf32> to vector<8x32xf32>
    %cst_54 = arith.constant dense<0.000000e+00> : vector<12x8xf32>
    %55 = tpu.matmul %9, %54, %cst_54 {dimension_numbers = #tpu.dot_dimension_numbers<[1], [1], [0], [0], [0, 0, 1, 0], [], []>} : vector<12x32xf32>, vector<8x32xf32>, vector<12x8xf32> -> vector<12x8xf32>
    %c1_55 = arith.constant 1 : index
    %c1_56 = arith.constant 1 : index
    %c0_57 = arith.constant 0 : index
    %c0_58 = arith.constant 0 : index
    %56 = vector.load %arg7[%c1_55, %c1_56, %c0_57, %c0_58] : memref<3x4x1x8xf32, #tpu.memory_space<vmem>>, vector<1x1x1x8xf32>
    %57 = vector.shape_cast %56 : vector<1x1x1x8xf32> to vector<1x8xf32>
    %58 = vector.broadcast %57 : vector<1x8xf32> to vector<12x8xf32>
    %59 = arith.addf %55, %58 : vector<12x8xf32>
    %c2_59 = arith.constant 2 : index
    %c1_60 = arith.constant 1 : index
    %c0_61 = arith.constant 0 : index
    %c0_62 = arith.constant 0 : index
    %60 = vector.load %arg6[%c2_59, %c1_60, %c0_61, %c0_62] : memref<3x4x8x32xf32, #tpu.memory_space<vmem>>, vector<1x1x8x32xf32>
    %61 = vector.shape_cast %60 : vector<1x1x8x32xf32> to vector<8x32xf32>
    %cst_63 = arith.constant dense<0.000000e+00> : vector<12x8xf32>
    %62 = tpu.matmul %6, %61, %cst_63 {dimension_numbers = #tpu.dot_dimension_numbers<[1], [1], [0], [0], [0, 0, 1, 0], [], []>} : vector<12x32xf32>, vector<8x32xf32>, vector<12x8xf32> -> vector<12x8xf32>
    %c2_64 = arith.constant 2 : index
    %c1_65 = arith.constant 1 : index
    %c0_66 = arith.constant 0 : index
    %c0_67 = arith.constant 0 : index
    %63 = vector.load %arg7[%c2_64, %c1_65, %c0_66, %c0_67] : memref<3x4x1x8xf32, #tpu.memory_space<vmem>>, vector<1x1x1x8xf32>
    %64 = vector.shape_cast %63 : vector<1x1x1x8xf32> to vector<1x8xf32>
    %65 = vector.broadcast %64 : vector<1x8xf32> to vector<12x8xf32>
    %66 = arith.addf %62, %65 : vector<12x8xf32>
    %cst_68 = arith.constant dense<0.000000e+00> : vector<8x12xf32>
    %67 = tpu.matmul %52, %59, %cst_68 {dimension_numbers = #tpu.dot_dimension_numbers<[1], [1], [0], [0], [0, 0, 1, 0], [], []>} : vector<8x8xf32>, vector<12x8xf32>, vector<8x12xf32> -> vector<8x12xf32>
    %cst_69 = arith.constant dense<0xFF800000> : vector<8xf32>
    %68 = vector.multi_reduction <maximumf>, %67, %cst_69 [1] : vector<8x12xf32> to vector<8xf32>
    %69 = vector.shape_cast %68 : vector<8xf32> to vector<8x1xf32>
    %70 = vector.broadcast %69 : vector<8x1xf32> to vector<8x12xf32>
    %71 = arith.subf %67, %70 : vector<8x12xf32>
    %72 = math.exp %71 : vector<8x12xf32>
    %cst_70 = arith.constant dense<0.000000e+00> : vector<8xf32>
    %73 = vector.multi_reduction <add>, %72, %cst_70 [1] : vector<8x12xf32> to vector<8xf32>
    %74 = vector.shape_cast %73 : vector<8xf32> to vector<8x1xf32>
    %cst_71 = arith.constant dense<0.000000e+00> : vector<8x8xf32>
    %75 = tpu.matmul %72, %66, %cst_71 {dimension_numbers = #tpu.dot_dimension_numbers<[1], [0], [0], [1], [0, 0, 1, 1], [], []>} : vector<8x12xf32>, vector<12x8xf32>, vector<8x8xf32> -> vector<8x8xf32>
    %76 = vector.broadcast %74 : vector<8x1xf32> to vector<8x8xf32>
    %77 = arith.divf %75, %76 : vector<8x8xf32>
    %c0_72 = arith.constant 0 : index
    %c2_73 = arith.constant 2 : index
    %c0_74 = arith.constant 0 : index
    %c0_75 = arith.constant 0 : index
    %78 = vector.load %arg6[%c0_72, %c2_73, %c0_74, %c0_75] : memref<3x4x8x32xf32, #tpu.memory_space<vmem>>, vector<1x1x8x32xf32>
    %79 = vector.shape_cast %78 : vector<1x1x8x32xf32> to vector<8x32xf32>
    %cst_76 = arith.constant dense<0.000000e+00> : vector<8x8xf32>
    %80 = tpu.matmul %4, %79, %cst_76 {dimension_numbers = #tpu.dot_dimension_numbers<[1], [1], [0], [0], [0, 0, 1, 0], [], []>} : vector<8x32xf32>, vector<8x32xf32>, vector<8x8xf32> -> vector<8x8xf32>
    %c0_77 = arith.constant 0 : index
    %c2_78 = arith.constant 2 : index
    %c0_79 = arith.constant 0 : index
    %c0_80 = arith.constant 0 : index
    %81 = vector.load %arg7[%c0_77, %c2_78, %c0_79, %c0_80] : memref<3x4x1x8xf32, #tpu.memory_space<vmem>>, vector<1x1x1x8xf32>
    %82 = vector.shape_cast %81 : vector<1x1x1x8xf32> to vector<1x8xf32>
    %83 = vector.broadcast %82 : vector<1x8xf32> to vector<8x8xf32>
    %84 = arith.addf %80, %83 : vector<8x8xf32>
    %cst_81 = arith.constant 0.353553385 : f32
    %85 = vector.broadcast %cst_81 : f32 to vector<8x8xf32>
    %86 = arith.mulf %84, %85 : vector<8x8xf32>
    %c1_82 = arith.constant 1 : index
    %c2_83 = arith.constant 2 : index
    %c0_84 = arith.constant 0 : index
    %c0_85 = arith.constant 0 : index
    %87 = vector.load %arg6[%c1_82, %c2_83, %c0_84, %c0_85] : memref<3x4x8x32xf32, #tpu.memory_space<vmem>>, vector<1x1x8x32xf32>
    %88 = vector.shape_cast %87 : vector<1x1x8x32xf32> to vector<8x32xf32>
    %cst_86 = arith.constant dense<0.000000e+00> : vector<12x8xf32>
    %89 = tpu.matmul %9, %88, %cst_86 {dimension_numbers = #tpu.dot_dimension_numbers<[1], [1], [0], [0], [0, 0, 1, 0], [], []>} : vector<12x32xf32>, vector<8x32xf32>, vector<12x8xf32> -> vector<12x8xf32>
    %c1_87 = arith.constant 1 : index
    %c2_88 = arith.constant 2 : index
    %c0_89 = arith.constant 0 : index
    %c0_90 = arith.constant 0 : index
    %90 = vector.load %arg7[%c1_87, %c2_88, %c0_89, %c0_90] : memref<3x4x1x8xf32, #tpu.memory_space<vmem>>, vector<1x1x1x8xf32>
    %91 = vector.shape_cast %90 : vector<1x1x1x8xf32> to vector<1x8xf32>
    %92 = vector.broadcast %91 : vector<1x8xf32> to vector<12x8xf32>
    %93 = arith.addf %89, %92 : vector<12x8xf32>
    %c2_91 = arith.constant 2 : index
    %c2_92 = arith.constant 2 : index
    %c0_93 = arith.constant 0 : index
    %c0_94 = arith.constant 0 : index
    %94 = vector.load %arg6[%c2_91, %c2_92, %c0_93, %c0_94] : memref<3x4x8x32xf32, #tpu.memory_space<vmem>>, vector<1x1x8x32xf32>
    %95 = vector.shape_cast %94 : vector<1x1x8x32xf32> to vector<8x32xf32>
    %cst_95 = arith.constant dense<0.000000e+00> : vector<12x8xf32>
    %96 = tpu.matmul %6, %95, %cst_95 {dimension_numbers = #tpu.dot_dimension_numbers<[1], [1], [0], [0], [0, 0, 1, 0], [], []>} : vector<12x32xf32>, vector<8x32xf32>, vector<12x8xf32> -> vector<12x8xf32>
    %c2_96 = arith.constant 2 : index
    %c2_97 = arith.constant 2 : index
    %c0_98 = arith.constant 0 : index
    %c0_99 = arith.constant 0 : index
    %97 = vector.load %arg7[%c2_96, %c2_97, %c0_98, %c0_99] : memref<3x4x1x8xf32, #tpu.memory_space<vmem>>, vector<1x1x1x8xf32>
    %98 = vector.shape_cast %97 : vector<1x1x1x8xf32> to vector<1x8xf32>
    %99 = vector.broadcast %98 : vector<1x8xf32> to vector<12x8xf32>
    %100 = arith.addf %96, %99 : vector<12x8xf32>
    %cst_100 = arith.constant dense<0.000000e+00> : vector<8x12xf32>
    %101 = tpu.matmul %86, %93, %cst_100 {dimension_numbers = #tpu.dot_dimension_numbers<[1], [1], [0], [0], [0, 0, 1, 0], [], []>} : vector<8x8xf32>, vector<12x8xf32>, vector<8x12xf32> -> vector<8x12xf32>
    %cst_101 = arith.constant dense<0xFF800000> : vector<8xf32>
    %102 = vector.multi_reduction <maximumf>, %101, %cst_101 [1] : vector<8x12xf32> to vector<8xf32>
    %103 = vector.shape_cast %102 : vector<8xf32> to vector<8x1xf32>
    %104 = vector.broadcast %103 : vector<8x1xf32> to vector<8x12xf32>
    %105 = arith.subf %101, %104 : vector<8x12xf32>
    %106 = math.exp %105 : vector<8x12xf32>
    %cst_102 = arith.constant dense<0.000000e+00> : vector<8xf32>
    %107 = vector.multi_reduction <add>, %106, %cst_102 [1] : vector<8x12xf32> to vector<8xf32>
    %108 = vector.shape_cast %107 : vector<8xf32> to vector<8x1xf32>
    %cst_103 = arith.constant dense<0.000000e+00> : vector<8x8xf32>
    %109 = tpu.matmul %106, %100, %cst_103 {dimension_numbers = #tpu.dot_dimension_numbers<[1], [0], [0], [1], [0, 0, 1, 1], [], []>} : vector<8x12xf32>, vector<12x8xf32>, vector<8x8xf32> -> vector<8x8xf32>
    %110 = vector.broadcast %108 : vector<8x1xf32> to vector<8x8xf32>
    %111 = arith.divf %109, %110 : vector<8x8xf32>
    %c0_104 = arith.constant 0 : index
    %c3 = arith.constant 3 : index
    %c0_105 = arith.constant 0 : index
    %c0_106 = arith.constant 0 : index
    %112 = vector.load %arg6[%c0_104, %c3, %c0_105, %c0_106] : memref<3x4x8x32xf32, #tpu.memory_space<vmem>>, vector<1x1x8x32xf32>
    %113 = vector.shape_cast %112 : vector<1x1x8x32xf32> to vector<8x32xf32>
    %cst_107 = arith.constant dense<0.000000e+00> : vector<8x8xf32>
    %114 = tpu.matmul %4, %113, %cst_107 {dimension_numbers = #tpu.dot_dimension_numbers<[1], [1], [0], [0], [0, 0, 1, 0], [], []>} : vector<8x32xf32>, vector<8x32xf32>, vector<8x8xf32> -> vector<8x8xf32>
    %c0_108 = arith.constant 0 : index
    %c3_109 = arith.constant 3 : index
    %c0_110 = arith.constant 0 : index
    %c0_111 = arith.constant 0 : index
    %115 = vector.load %arg7[%c0_108, %c3_109, %c0_110, %c0_111] : memref<3x4x1x8xf32, #tpu.memory_space<vmem>>, vector<1x1x1x8xf32>
    %116 = vector.shape_cast %115 : vector<1x1x1x8xf32> to vector<1x8xf32>
    %117 = vector.broadcast %116 : vector<1x8xf32> to vector<8x8xf32>
    %118 = arith.addf %114, %117 : vector<8x8xf32>
    %cst_112 = arith.constant 0.353553385 : f32
    %119 = vector.broadcast %cst_112 : f32 to vector<8x8xf32>
    %120 = arith.mulf %118, %119 : vector<8x8xf32>
    %c1_113 = arith.constant 1 : index
    %c3_114 = arith.constant 3 : index
    %c0_115 = arith.constant 0 : index
    %c0_116 = arith.constant 0 : index
    %121 = vector.load %arg6[%c1_113, %c3_114, %c0_115, %c0_116] : memref<3x4x8x32xf32, #tpu.memory_space<vmem>>, vector<1x1x8x32xf32>
    %122 = vector.shape_cast %121 : vector<1x1x8x32xf32> to vector<8x32xf32>
    %cst_117 = arith.constant dense<0.000000e+00> : vector<12x8xf32>
    %123 = tpu.matmul %9, %122, %cst_117 {dimension_numbers = #tpu.dot_dimension_numbers<[1], [1], [0], [0], [0, 0, 1, 0], [], []>} : vector<12x32xf32>, vector<8x32xf32>, vector<12x8xf32> -> vector<12x8xf32>
    %c1_118 = arith.constant 1 : index
    %c3_119 = arith.constant 3 : index
    %c0_120 = arith.constant 0 : index
    %c0_121 = arith.constant 0 : index
    %124 = vector.load %arg7[%c1_118, %c3_119, %c0_120, %c0_121] : memref<3x4x1x8xf32, #tpu.memory_space<vmem>>, vector<1x1x1x8xf32>
    %125 = vector.shape_cast %124 : vector<1x1x1x8xf32> to vector<1x8xf32>
    %126 = vector.broadcast %125 : vector<1x8xf32> to vector<12x8xf32>
    %127 = arith.addf %123, %126 : vector<12x8xf32>
    %c2_122 = arith.constant 2 : index
    %c3_123 = arith.constant 3 : index
    %c0_124 = arith.constant 0 : index
    %c0_125 = arith.constant 0 : index
    %128 = vector.load %arg6[%c2_122, %c3_123, %c0_124, %c0_125] : memref<3x4x8x32xf32, #tpu.memory_space<vmem>>, vector<1x1x8x32xf32>
    %129 = vector.shape_cast %128 : vector<1x1x8x32xf32> to vector<8x32xf32>
    %cst_126 = arith.constant dense<0.000000e+00> : vector<12x8xf32>
    %130 = tpu.matmul %6, %129, %cst_126 {dimension_numbers = #tpu.dot_dimension_numbers<[1], [1], [0], [0], [0, 0, 1, 0], [], []>} : vector<12x32xf32>, vector<8x32xf32>, vector<12x8xf32> -> vector<12x8xf32>
    %c2_127 = arith.constant 2 : index
    %c3_128 = arith.constant 3 : index
    %c0_129 = arith.constant 0 : index
    %c0_130 = arith.constant 0 : index
    %131 = vector.load %arg7[%c2_127, %c3_128, %c0_129, %c0_130] : memref<3x4x1x8xf32, #tpu.memory_space<vmem>>, vector<1x1x1x8xf32>
    %132 = vector.shape_cast %131 : vector<1x1x1x8xf32> to vector<1x8xf32>
    %133 = vector.broadcast %132 : vector<1x8xf32> to vector<12x8xf32>
    %134 = arith.addf %130, %133 : vector<12x8xf32>
    %cst_131 = arith.constant dense<0.000000e+00> : vector<8x12xf32>
    %135 = tpu.matmul %120, %127, %cst_131 {dimension_numbers = #tpu.dot_dimension_numbers<[1], [1], [0], [0], [0, 0, 1, 0], [], []>} : vector<8x8xf32>, vector<12x8xf32>, vector<8x12xf32> -> vector<8x12xf32>
    %cst_132 = arith.constant dense<0xFF800000> : vector<8xf32>
    %136 = vector.multi_reduction <maximumf>, %135, %cst_132 [1] : vector<8x12xf32> to vector<8xf32>
    %137 = vector.shape_cast %136 : vector<8xf32> to vector<8x1xf32>
    %138 = vector.broadcast %137 : vector<8x1xf32> to vector<8x12xf32>
    %139 = arith.subf %135, %138 : vector<8x12xf32>
    %140 = math.exp %139 : vector<8x12xf32>
    %cst_133 = arith.constant dense<0.000000e+00> : vector<8xf32>
    %141 = vector.multi_reduction <add>, %140, %cst_133 [1] : vector<8x12xf32> to vector<8xf32>
    %142 = vector.shape_cast %141 : vector<8xf32> to vector<8x1xf32>
    %cst_134 = arith.constant dense<0.000000e+00> : vector<8x8xf32>
    %143 = tpu.matmul %140, %134, %cst_134 {dimension_numbers = #tpu.dot_dimension_numbers<[1], [0], [0], [1], [0, 0, 1, 1], [], []>} : vector<8x12xf32>, vector<12x8xf32>, vector<8x8xf32> -> vector<8x8xf32>
    %144 = vector.broadcast %142 : vector<8x1xf32> to vector<8x8xf32>
    %145 = arith.divf %143, %144 : vector<8x8xf32>
    %146 = tpu.concatenate %43, %77, %111, %145 in 1 : vector<8x8xf32>, vector<8x8xf32>, vector<8x8xf32>, vector<8x8xf32> -> vector<8x32xf32>
    %c0_135 = arith.constant 0 : index
    %c0_136 = arith.constant 0 : index
    %147 = vector.load %arg8[%c0_135, %c0_136] : memref<32x32xf32, #tpu.memory_space<vmem>>, vector<32x32xf32>
    %cst_137 = arith.constant dense<0.000000e+00> : vector<8x32xf32>
    %148 = tpu.matmul %146, %147, %cst_137 {dimension_numbers = #tpu.dot_dimension_numbers<[1], [1], [0], [0], [0, 0, 1, 0], [], []>} : vector<8x32xf32>, vector<32x32xf32>, vector<8x32xf32> -> vector<8x32xf32>
    %c0_138 = arith.constant 0 : index
    %c0_139 = arith.constant 0 : index
    %149 = vector.load %arg9[%c0_138, %c0_139] : memref<1x32xf32, #tpu.memory_space<vmem>>, vector<1x32xf32>
    %150 = vector.broadcast %149 : vector<1x32xf32> to vector<8x32xf32>
    %151 = arith.addf %148, %150 : vector<8x32xf32>
    %152 = arith.addf %1, %151 : vector<8x32xf32>
    %cst_140 = arith.constant dense<0.000000e+00> : vector<8xf32>
    %153 = vector.multi_reduction <add>, %152, %cst_140 [1] : vector<8x32xf32> to vector<8xf32>
    %154 = vector.shape_cast %153 : vector<8xf32> to vector<8x1xf32>
    %cst_141 = arith.constant 3.200000e+01 : f32
    %155 = vector.broadcast %cst_141 : f32 to vector<8x1xf32>
    %156 = arith.divf %154, %155 : vector<8x1xf32>
    %157 = vector.broadcast %156 : vector<8x1xf32> to vector<8x32xf32>
    %158 = arith.subf %152, %157 : vector<8x32xf32>
    %159 = arith.mulf %158, %158 : vector<8x32xf32>
    %cst_142 = arith.constant dense<0.000000e+00> : vector<8xf32>
    %160 = vector.multi_reduction <add>, %159, %cst_142 [1] : vector<8x32xf32> to vector<8xf32>
    %161 = vector.shape_cast %160 : vector<8xf32> to vector<8x1xf32>
    %cst_143 = arith.constant 3.200000e+01 : f32
    %162 = vector.broadcast %cst_143 : f32 to vector<8x1xf32>
    %163 = arith.divf %161, %162 : vector<8x1xf32>
    %cst_144 = arith.constant 9.99999974E-6 : f32
    %164 = vector.broadcast %cst_144 : f32 to vector<8x1xf32>
    %165 = arith.addf %163, %164 : vector<8x1xf32>
    %166 = math.rsqrt %165 : vector<8x1xf32>
    %167 = vector.broadcast %166 : vector<8x1xf32> to vector<8x32xf32>
    %168 = arith.mulf %158, %167 : vector<8x32xf32>
    %c0_145 = arith.constant 0 : index
    %c0_146 = arith.constant 0 : index
    %169 = vector.load %arg10[%c0_145, %c0_146] : memref<1x32xf32, #tpu.memory_space<vmem>>, vector<1x32xf32>
    %170 = vector.broadcast %169 : vector<1x32xf32> to vector<8x32xf32>
    %171 = arith.mulf %168, %170 : vector<8x32xf32>
    %c0_147 = arith.constant 0 : index
    %c0_148 = arith.constant 0 : index
    %172 = vector.load %arg11[%c0_147, %c0_148] : memref<1x32xf32, #tpu.memory_space<vmem>>, vector<1x32xf32>
    %173 = vector.broadcast %172 : vector<1x32xf32> to vector<8x32xf32>
    %174 = arith.addf %171, %173 : vector<8x32xf32>
    %c0_149 = arith.constant 0 : index
    %c0_150 = arith.constant 0 : index
    %c0_151 = arith.constant 0 : index
    %175 = vector.load %arg12[%c0_149, %c0_150, %c0_151] : memref<1x8x32xf32, #tpu.memory_space<vmem>>, vector<1x8x32xf32>
    %176 = vector.shape_cast %175 : vector<1x8x32xf32> to vector<8x32xf32>
    %177 = vector.shape_cast %174 : vector<8x32xf32> to vector<1x8x32xf32>
    tpu.vector_store %arg12[%c0_149, %c0_150, %c0_151], %177 {strides = array<i32>} : memref<1x8x32xf32, #tpu.memory_space<vmem>>, vector<1x8x32xf32>,
    return
  }
  func.func @transform_0(%arg0: i32, %arg1: i32) -> (i32, i32, i32) {
    %c0_i32 = arith.constant 0 : i32
    %c0_i32_0 = arith.constant 0 : i32
    return %arg0, %arg1, %c0_i32 : i32, i32, i32
  }
  func.func @transform_1(%arg0: i32, %arg1: i32) -> (i32, i32, i32) {
    %c0_i32 = arith.constant 0 : i32
    %c0_i32_0 = arith.constant 0 : i32
    return %arg0, %arg1, %c0_i32 : i32, i32, i32
  }
  func.func @transform_2(%arg0: i32, %arg1: i32) -> (i32, i32, i32) {
    %c0_i32 = arith.constant 0 : i32
    %c0_i32_0 = arith.constant 0 : i32
    %c0_i32_1 = arith.constant 0 : i32
    return %arg0, %c0_i32, %c0_i32_0 : i32, i32, i32
  }
  func.func @transform_3(%arg0: i32, %arg1: i32) -> (i32, i32, i32) {
    %c0_i32 = arith.constant 0 : i32
    %c0_i32_0 = arith.constant 0 : i32
    %c0_i32_1 = arith.constant 0 : i32
    return %arg0, %c0_i32, %c0_i32_0 : i32, i32, i32
  }
  func.func @transform_4(%arg0: i32, %arg1: i32) -> (i32, i32, i32, i32) {
    %c0_i32 = arith.constant 0 : i32
    %c0_i32_0 = arith.constant 0 : i32
    %c0_i32_1 = arith.constant 0 : i32
    %c0_i32_2 = arith.constant 0 : i32
    %c0_i32_3 = arith.constant 0 : i32
    return %c0_i32, %c0_i32_0, %c0_i32_1, %c0_i32_2 : i32, i32, i32, i32
  }
  func.func @transform_5(%arg0: i32, %arg1: i32) -> (i32, i32, i32, i32) {
    %c0_i32 = arith.constant 0 : i32
    %c0_i32_0 = arith.constant 0 : i32
    %c0_i32_1 = arith.constant 0 : i32
    %c0_i32_2 = arith.constant 0 : i32
    %c0_i32_3 = arith.constant 0 : i32
    return %c0_i32, %c0_i32_0, %c0_i32_1, %c0_i32_2 : i32, i32, i32, i32
  }
  func.func @transform_6(%arg0: i32, %arg1: i32) -> (i32, i32) {
    %c0_i32 = arith.constant 0 : i32
    %c0_i32_0 = arith.constant 0 : i32
    %c0_i32_1 = arith.constant 0 : i32
    return %c0_i32, %c0_i32_0 : i32, i32
  }
  func.func @transform_7(%arg0: i32, %arg1: i32) -> (i32, i32) {
    %c0_i32 = arith.constant 0 : i32
    %c0_i32_0 = arith.constant 0 : i32
    %c0_i32_1 = arith.constant 0 : i32
    return %c0_i32, %c0_i32_0 : i32, i32
  }
  func.func @transform_8(%arg0: i32, %arg1: i32) -> (i32, i32) {
    %c0_i32 = arith.constant 0 : i32
    %c0_i32_0 = arith.constant 0 : i32
    %c0_i32_1 = arith.constant 0 : i32
    return %c0_i32, %c0_i32_0 : i32, i32
  }
  func.func @transform_9(%arg0: i32, %arg1: i32) -> (i32, i32) {
    %c0_i32 = arith.constant 0 : i32
    %c0_i32_0 = arith.constant 0 : i32
    %c0_i32_1 = arith.constant 0 : i32
    return %c0_i32, %c0_i32_0 : i32, i32
  }
  func.func @transform_10(%arg0: i32, %arg1: i32) -> (i32, i32, i32) {
    %c0_i32 = arith.constant 0 : i32
    %c0_i32_0 = arith.constant 0 : i32
    return %arg0, %arg1, %c0_i32 : i32, i32, i32
  }
}

</mosaic_0001>

<llo_original>
// kernel: cross_attention_layer_forward.1
$region0: #{cross_attention_layer_forward.1}
  #allocation0 [shape = 'u32[]', space=smem, size = 0x4, offset = 0x4, fixed_abs, tag = 'smem constant byte address 0x4 - core index']
  #allocation1 [shape = 'u32[144,128]{1,0:T(1,128)}', space=vmem, size = 0x12000, scoped, tag = 'internal scratch']
  %s0 = inlined_call_operand.vmem [shape: f32[2,8,32], index: 0, kind: input, shape index: {}]
  %s1 = inlined_call_operand.vmem [shape: f32[2,8,32], index: 1, kind: input, shape index: {}]
  %s2 = inlined_call_operand.vmem [shape: f32[2,12,32], index: 2, kind: input, shape index: {}]
  %s3 = inlined_call_operand.vmem [shape: f32[2,12,32], index: 3, kind: input, shape index: {}]
  %s4 = inlined_call_operand.vmem [shape: f32[3,4,8,32], index: 4, kind: input, shape index: {}]
  %s5 = inlined_call_operand.vmem [shape: f32[3,4,1,8], index: 5, kind: input, shape index: {}]
  %s6 = inlined_call_operand.vmem [shape: f32[32,32], index: 6, kind: input, shape index: {}]
  %s7 = inlined_call_operand.vmem [shape: f32[1,32], index: 7, kind: input, shape index: {}]
  %s8 = inlined_call_operand.vmem [shape: f32[1,32], index: 8, kind: input, shape index: {}]
  %s9 = inlined_call_operand.vmem [shape: f32[1,32], index: 9, kind: input, shape index: {}]
  %s10 = inlined_call_operand.vmem [shape: f32[2,8,32], index: 10, kind: output, shape index: {}]
  %s11 = sld [smem:[#allocation0]]
  $region73: #{cross_attention_layer_forward.1} parent=0
    _
  %s13 = ssub.s32 1, %s11
  %s14 = scalar_select 0, %s13, %s11
  loop: start=0, step=1, limit=4
  $region2: #{cross_attention_layer_forward.1} parent=0 // loop_pre_header
    _
  $region3: #{cross_attention_layer_forward.1} parent=0 // loop_header
    %s16 = sphi 0, %s20
    %p17 = scmp.ge.s32.totalorder %s16, 4
    %s23 = sphi 0, %s35
    %s24 = sphi 0, %s31
    %s25 = sphi 0, %s23
    %s26 = sphi 0, %s24
    %s27 = sphi 0, %s25
    %s28 = sphi 0, %s26
    %s40 = sphi 0, %s42
    %s43 = sphi 0, %s40
    %s44 = sphi 0, %s43
    %s60 = sphi 0, %s44
    %s68 = sphi 0, %s70
    %s71 = sphi 0, %s68
    %s72 = sphi 0, %s71
    %s88 = sphi 0, %s72
    %s94 = sphi 0, %s96
    %s97 = sphi 0, %s94
    %s98 = sphi 0, %s97
    %s114 = sphi 0, %s98
    %s120 = sphi 0, %s122
    %s123 = sphi 0, %s120
    %s124 = sphi 0, %s123
    %s140 = sphi 0, %s124
    %s144 = sphi 0, %s144
    %s146 = sphi 0, %s144
    %s147 = sphi 0, %s146
    %s161 = sphi 0, %s147
    %s165 = sphi 0, %s165
    %s167 = sphi 0, %s165
    %s168 = sphi 0, %s167
    %s182 = sphi 0, %s168
    %s186 = sphi 0, %s186
    %s188 = sphi 0, %s186
    %s189 = sphi 0, %s188
    %s203 = sphi 0, %s189
    %s207 = sphi 0, %s207
    %s209 = sphi 0, %s207
    %s210 = sphi 0, %s209
    %s224 = sphi 0, %s210
    %s228 = sphi 0, %s228
    %s230 = sphi 0, %s228
    %s231 = sphi 0, %s230
    %s245 = sphi 0, %s231
    %s249 = sphi 0, %s249
    %s251 = sphi 0, %s249
    %s252 = sphi 0, %s251
    %s266 = sphi 0, %s252
    %s274 = sphi 0, %s276
    %s277 = sphi 0, %s274
    %s278 = sphi 0, %s277
    %s294 = sphi 0, %s278
  $region4: #{cross_attention_layer_forward.1} parent=0 // loop_header_branch
    %19 = sbr.rel (%p17) target = $region8
  $region5: #{cross_attention_layer_forward.1} parent=0 // loop_body
    %s21 = ssub.s32 %s16, 1
    %s22 = ssub.s32 %s16, 2
    %s29 = sadd.s32 1, %s24
    %p30 = scmp.ge.s32.totalorder %s29, 1
    %s31 = scalar_select %p30, 0, %s29
    %s32 = sadd.s32 1, %s23
    %s33 = scalar_select %p30, %s32, %s23
    %p34 = scmp.ge.s32.totalorder %s33, 2
    %s35 = scalar_select %p34, 0, %s33
    %s36 = ssub.s32 %s23, %s35
    %s37 = ssub.s32 %s24, %s31
    %s38 = sor.u32 %s36, %s37
    %p39 = scmp.eq.s32.totalorder %s38, 0
    %s41 = sadd.s32 %s40, 1
    %s42 = scalar_select %p39, %s40, %s41
    %p45 = pneg %p39
    %p46 = scmp.eq.s32.totalorder %s16, 1
    %p47 = por %p45, %p46
    %p48 = scmp.ne.s32.totalorder %s40, %s43
    %p49 = scmp.eq.s32.totalorder %s16, 0
    %p50 = por %p48, %p49
    %p51 = scmp.ne.s32.totalorder %s40, %s43
    %p52 = scmp.eq.s32.totalorder %s21, 1
    %p53 = por %p51, %p52
    %p54 = scmp.ne.s32.totalorder %s43, %s44
    %p55 = scmp.eq.s32.totalorder %s21, 0
    %p56 = por %p54, %p55
    %p57 = scmp.ne.s32.totalorder %s43, %s44
    %p58 = scmp.eq.s32.totalorder %s22, 1
    %p59 = por %p57, %p58
    %p61 = scmp.ne.s32.totalorder %s44, %s60
    %p62 = scmp.eq.s32.totalorder %s22, 0
    %p63 = por %p61, %p62
    %s64 = ssub.s32 %s23, %s35
    %s65 = ssub.s32 %s24, %s31
    %s66 = sor.u32 %s64, %s65
    %p67 = scmp.eq.s32.totalorder %s66, 0
    %s69 = sadd.s32 %s68, 1
    %s70 = scalar_select %p67, %s68, %s69
    %p73 = pneg %p67
    %p74 = scmp.eq.s32.totalorder %s16, 1
    %p75 = por %p73, %p74
    %p76 = scmp.ne.s32.totalorder %s68, %s71
    %p77 = scmp.eq.s32.totalorder %s16, 0
    %p78 = por %p76, %p77
    %p79 = scmp.ne.s32.totalorder %s68, %s71
    %p80 = scmp.eq.s32.totalorder %s21, 1
    %p81 = por %p79, %p80
    %p82 = scmp.ne.s32.totalorder %s71, %s72
    %p83 = scmp.eq.s32.totalorder %s21, 0
    %p84 = por %p82, %p83
    %p85 = scmp.ne.s32.totalorder %s71, %s72
    %p86 = scmp.eq.s32.totalorder %s22, 1
    %p87 = por %p85, %p86
    %p89 = scmp.ne.s32.totalorder %s72, %s88
    %p90 = scmp.eq.s32.totalorder %s22, 0
    %p91 = por %p89, %p90
    %s92 = ssub.s32 %s23, %s35
    %p93 = scmp.eq.s32.totalorder %s92, 0
    %s95 = sadd.s32 %s94, 1
    %s96 = scalar_select %p93, %s94, %s95
    %p99 = pneg %p93
    %p100 = scmp.eq.s32.totalorder %s16, 1
    %p101 = por %p99, %p100
    %p102 = scmp.ne.s32.totalorder %s94, %s97
    %p103 = scmp.eq.s32.totalorder %s16, 0
    %p104 = por %p102, %p103
    %p105 = scmp.ne.s32.totalorder %s94, %s97
    %p106 = scmp.eq.s32.totalorder %s21, 1
    %p107 = por %p105, %p106
    %p108 = scmp.ne.s32.totalorder %s97, %s98
    %p109 = scmp.eq.s32.totalorder %s21, 0
    %p110 = por %p108, %p109
    %p111 = scmp.ne.s32.totalorder %s97, %s98
    %p112 = scmp.eq.s32.totalorder %s22, 1
    %p113 = por %p111, %p112
    %p115 = scmp.ne.s32.totalorder %s98, %s114
    %p116 = scmp.eq.s32.totalorder %s22, 0
    %p117 = por %p115, %p116
    %s118 = ssub.s32 %s23, %s35
    %p119 = scmp.eq.s32.totalorder %s118, 0
    %s121 = sadd.s32 %s120, 1
    %s122 = scalar_select %p119, %s120, %s121
    %p125 = pneg %p119
    %p126 = scmp.eq.s32.totalorder %s16, 1
    %p127 = por %p125, %p126
    %p128 = scmp.ne.s32.totalorder %s120, %s123
    %p129 = scmp.eq.s32.totalorder %s16, 0
    %p130 = por %p128, %p129
    %p131 = scmp.ne.s32.totalorder %s120, %s123
    %p132 = scmp.eq.s32.totalorder %s21, 1
    %p133 = por %p131, %p132
    %p134 = scmp.ne.s32.totalorder %s123, %s124
    %p135 = scmp.eq.s32.totalorder %s21, 0
    %p136 = por %p134, %p135
    %p137 = scmp.ne.s32.totalorder %s123, %s124
    %p138 = scmp.eq.s32.totalorder %s22, 1
    %p139 = por %p137, %p138
    %p141 = scmp.ne.s32.totalorder %s124, %s140
    %p142 = scmp.eq.s32.totalorder %s22, 0
    %p143 = por %p141, %p142
    %s145 = sadd.s32 %s144, 1
    %p148 = scmp.eq.s32.totalorder %s16, 1
    %p149 = scmp.ne.s32.totalorder %s144, %s146
    %p150 = scmp.eq.s32.totalorder %s16, 0
    %p151 = por %p149, %p150
    %p152 = scmp.ne.s32.totalorder %s144, %s146
    %p153 = scmp.eq.s32.totalorder %s21, 1
    %p154 = por %p152, %p153
    %p155 = scmp.ne.s32.totalorder %s146, %s147
    %p156 = scmp.eq.s32.totalorder %s21, 0
    %p157 = por %p155, %p156
    %p158 = scmp.ne.s32.totalorder %s146, %s147
    %p159 = scmp.eq.s32.totalorder %s22, 1
    %p160 = por %p158, %p159
    %p162 = scmp.ne.s32.totalorder %s147, %s161
    %p163 = scmp.eq.s32.totalorder %s22, 0
    %p164 = por %p162, %p163
    %s166 = sadd.s32 %s165, 1
    %p169 = scmp.eq.s32.totalorder %s16, 1
    %p170 = scmp.ne.s32.totalorder %s165, %s167
    %p171 = scmp.eq.s32.totalorder %s16, 0
    %p172 = por %p170, %p171
    %p173 = scmp.ne.s32.totalorder %s165, %s167
    %p174 = scmp.eq.s32.totalorder %s21, 1
    %p175 = por %p173, %p174
    %p176 = scmp.ne.s32.totalorder %s167, %s168
    %p177 = scmp.eq.s32.totalorder %s21, 0
    %p178 = por %p176, %p177
    %p179 = scmp.ne.s32.totalorder %s167, %s168
    %p180 = scmp.eq.s32.totalorder %s22, 1
    %p181 = por %p179, %p180
    %p183 = scmp.ne.s32.totalorder %s168, %s182
    %p184 = scmp.eq.s32.totalorder %s22, 0
    %p185 = por %p183, %p184
    %s187 = sadd.s32 %s186, 1
    %p190 = scmp.eq.s32.totalorder %s16, 1
    %p191 = scmp.ne.s32.totalorder %s186, %s188
    %p192 = scmp.eq.s32.totalorder %s16, 0
    %p193 = por %p191, %p192
    %p194 = scmp.ne.s32.totalorder %s186, %s188
    %p195 = scmp.eq.s32.totalorder %s21, 1
    %p196 = por %p194, %p195
    %p197 = scmp.ne.s32.totalorder %s188, %s189
    %p198 = scmp.eq.s32.totalorder %s21, 0
    %p199 = por %p197, %p198
    %p200 = scmp.ne.s32.totalorder %s188, %s189
    %p201 = scmp.eq.s32.totalorder %s22, 1
    %p202 = por %p200, %p201
    %p204 = scmp.ne.s32.totalorder %s189, %s203
    %p205 = scmp.eq.s32.totalorder %s22, 0
    %p206 = por %p204, %p205
    %s208 = sadd.s32 %s207, 1
    %p211 = scmp.eq.s32.totalorder %s16, 1
    %p212 = scmp.ne.s32.totalorder %s207, %s209
    %p213 = scmp.eq.s32.totalorder %s16, 0
    %p214 = por %p212, %p213
    %p215 = scmp.ne.s32.totalorder %s207, %s209
    %p216 = scmp.eq.s32.totalorder %s21, 1
    %p217 = por %p215, %p216
    %p218 = scmp.ne.s32.totalorder %s209, %s210
    %p219 = scmp.eq.s32.totalorder %s21, 0
    %p220 = por %p218, %p219
    %p221 = scmp.ne.s32.totalorder %s209, %s210
    %p222 = scmp.eq.s32.totalorder %s22, 1
    %p223 = por %p221, %p222
    %p225 = scmp.ne.s32.totalorder %s210, %s224
    %p226 = scmp.eq.s32.totalorder %s22, 0
    %p227 = por %p225, %p226
    %s229 = sadd.s32 %s228, 1
    %p232 = scmp.eq.s32.totalorder %s16, 1
    %p233 = scmp.ne.s32.totalorder %s228, %s230
    %p234 = scmp.eq.s32.totalorder %s16, 0
    %p235 = por %p233, %p234
    %p236 = scmp.ne.s32.totalorder %s228, %s230
    %p237 = scmp.eq.s32.totalorder %s21, 1
    %p238 = por %p236, %p237
    %p239 = scmp.ne.s32.totalorder %s230, %s231
    %p240 = scmp.eq.s32.totalorder %s21, 0
    %p241 = por %p239, %p240
    %p242 = scmp.ne.s32.totalorder %s230, %s231
    %p243 = scmp.eq.s32.totalorder %s22, 1
    %p244 = por %p242, %p243
    %p246 = scmp.ne.s32.totalorder %s231, %s245
    %p247 = scmp.eq.s32.totalorder %s22, 0
    %p248 = por %p246, %p247
    %s250 = sadd.s32 %s249, 1
    %p253 = scmp.eq.s32.totalorder %s16, 1
    %p254 = scmp.ne.s32.totalorder %s249, %s251
    %p255 = scmp.eq.s32.totalorder %s16, 0
    %p256 = por %p254, %p255
    %p257 = scmp.ne.s32.totalorder %s249, %s251
    %p258 = scmp.eq.s32.totalorder %s21, 1
    %p259 = por %p257, %p258
    %p260 = scmp.ne.s32.totalorder %s251, %s252
    %p261 = scmp.eq.s32.totalorder %s21, 0
    %p262 = por %p260, %p261
    %p263 = scmp.ne.s32.totalorder %s251, %s252
    %p264 = scmp.eq.s32.totalorder %s22, 1
    %p265 = por %p263, %p264
    %p267 = scmp.ne.s32.totalorder %s252, %s266
    %p268 = scmp.eq.s32.totalorder %s22, 0
    %p269 = por %p267, %p268
    %s270 = ssub.s32 %s23, %s35
    %s271 = ssub.s32 %s24, %s31
    %s272 = sor.u32 %s270, %s271
    %p273 = scmp.eq.s32.totalorder %s272, 0
    %s275 = sadd.s32 %s274, 1
    %s276 = scalar_select %p273, %s274, %s275
    %p279 = pneg %p273
    %p280 = scmp.eq.s32.totalorder %s16, 1
    %p281 = por %p279, %p280
    %p282 = scmp.ne.s32.totalorder %s274, %s277
    %p283 = scmp.eq.s32.totalorder %s16, 0
    %p284 = por %p282, %p283
    %p285 = scmp.ne.s32.totalorder %s274, %s277
    %p286 = scmp.eq.s32.totalorder %s21, 1
    %p287 = por %p285, %p286
    %p288 = scmp.ne.s32.totalorder %s277, %s278
    %p289 = scmp.eq.s32.totalorder %s21, 0
    %p290 = por %p288, %p289
    %p291 = scmp.ne.s32.totalorder %s277, %s278
    %p292 = scmp.eq.s32.totalorder %s22, 1
    %p293 = por %p291, %p292
    %p295 = scmp.ne.s32.totalorder %s278, %s294
    %p296 = scmp.eq.s32.totalorder %s22, 0
    %p297 = por %p295, %p296
    %p298 = scmp.le.s32.totalorder 1, %s16
    %p299 = scmp.lt.s32.totalorder %s16, 3
    %p300 = pnand %p298, %p299
    %p301 = pneg %p300
    // Predicated region
    $region9: #{cross_attention_layer_forward.1} parent=5 // pred_check
      _
    $region10: #{cross_attention_layer_forward.1} parent=5 // pred_check_branch
      %303 = sbr.rel (%p300) target = $region12
    $region11: #{cross_attention_layer_forward.1} parent=5 // pred_region
      %s304 = ssub.s32 %s16, 1
      // Predicated region
      $region13: #{cross_attention_layer_forward.1} parent=11 // pred_check
        %p305 = pneg %p157
      $region14: #{cross_attention_layer_forward.1} parent=11 // pred_check_branch
        %307 = sbr.rel (%p305) target = $region16
      $region15: #{cross_attention_layer_forward.1} parent=11 // pred_region
        _
      $region16: #{cross_attention_layer_forward.1} parent=11 // pred_fallthru
        _
      // Predicated region
      $region17: #{cross_attention_layer_forward.1} parent=11 // pred_check
        %p308 = pneg %p178
      $region18: #{cross_attention_layer_forward.1} parent=11 // pred_check_branch
        %310 = sbr.rel (%p308) target = $region20
      $region19: #{cross_attention_layer_forward.1} parent=11 // pred_region
        _
      $region20: #{cross_attention_layer_forward.1} parent=11 // pred_fallthru
        _
      // Predicated region
      $region21: #{cross_attention_layer_forward.1} parent=11 // pred_check
        %p311 = pneg %p199
      $region22: #{cross_attention_layer_forward.1} parent=11 // pred_check_branch
        %313 = sbr.rel (%p311) target = $region24
      $region23: #{cross_attention_layer_forward.1} parent=11 // pred_region
        _
      $region24: #{cross_attention_layer_forward.1} parent=11 // pred_fallthru
        _
      // Predicated region
      $region25: #{cross_attention_layer_forward.1} parent=11 // pred_check
        %p314 = pneg %p220
      $region26: #{cross_attention_layer_forward.1} parent=11 // pred_check_branch
        %316 = sbr.rel (%p314) target = $region28
      $region27: #{cross_attention_layer_forward.1} parent=11 // pred_region
        _
      $region28: #{cross_attention_layer_forward.1} parent=11 // pred_fallthru
        _
      // Predicated region
      $region29: #{cross_attention_layer_forward.1} parent=11 // pred_check
        %p317 = pneg %p241
      $region30: #{cross_attention_layer_forward.1} parent=11 // pred_check_branch
        %319 = sbr.rel (%p317) target = $region32
      $region31: #{cross_attention_layer_forward.1} parent=11 // pred_region
        _
      $region32: #{cross_attention_layer_forward.1} parent=11 // pred_fallthru
        _
      // Predicated region
      $region33: #{cross_attention_layer_forward.1} parent=11 // pred_check
        %p320 = pneg %p262
      $region34: #{cross_attention_layer_forward.1} parent=11 // pred_check_branch
        %322 = sbr.rel (%p320) target = $region36
      $region35: #{cross_attention_layer_forward.1} parent=11 // pred_region
        _
      $region36: #{cross_attention_layer_forward.1} parent=11 // pred_fallthru
        _
    $region12: #{cross_attention_layer_forward.1} parent=5 // pred_fallthru
      _
    %p323 = scmp.lt.s32.totalorder %s16, 2
    // Predicated region
    $region37: #{cross_attention_layer_forward.1} parent=5 // pred_check
      %p324 = pneg %p323
    $region38: #{cross_attention_layer_forward.1} parent=5 // pred_check_branch
      %326 = sbr.rel (%p324) target = $region40
    $region39: #{cross_attention_layer_forward.1} parent=5 // pred_region
      // Predicated region
      $region41: #{cross_attention_layer_forward.1} parent=39 // pred_check
        %p327 = pneg %p50
      $region42: #{cross_attention_layer_forward.1} parent=39 // pred_check_branch
        %329 = sbr.rel (%p327) target = $region44
      $region43: #{cross_attention_layer_forward.1} parent=39 // pred_region
        %p330 = scmp.lt.s32.totalorder %s23, 1
        %s331 = scalar_select %p330, %s23, 1
        %p332 = scmp.lt.s32.totalorder %s24, 0
        %s333 = scalar_select %p332, %s24, 0
        %s334 = sadd.s32 %s333, %s331
        %s335 = smul.addr %s334, 8
        %s336 = scalar_lea.vmem %s0, %s335
      $region44: #{cross_attention_layer_forward.1} parent=39 // pred_fallthru
        _
      // Predicated region
      $region45: #{cross_attention_layer_forward.1} parent=39 // pred_check
        %p337 = pneg %p78
      $region46: #{cross_attention_layer_forward.1} parent=39 // pred_check_branch
        %339 = sbr.rel (%p337) target = $region48
      $region47: #{cross_attention_layer_forward.1} parent=39 // pred_region
        %p340 = scmp.lt.s32.totalorder %s23, 1
        %s341 = scalar_select %p340, %s23, 1
        %p342 = scmp.lt.s32.totalorder %s24, 0
        %s343 = scalar_select %p342, %s24, 0
        %s344 = sadd.s32 %s343, %s341
        %s345 = smul.addr %s344, 8
        %s346 = scalar_lea.vmem %s1, %s345
      $region48: #{cross_attention_layer_forward.1} parent=39 // pred_fallthru
        _
      // Predicated region
      $region49: #{cross_attention_layer_forward.1} parent=39 // pred_check
        %p347 = pneg %p104
      $region50: #{cross_attention_layer_forward.1} parent=39 // pred_check_branch
        %349 = sbr.rel (%p347) target = $region52
      $region51: #{cross_attention_layer_forward.1} parent=39 // pred_region
        %p350 = scmp.lt.s32.totalorder %s23, 1
        %s351 = scalar_select %p350, %s23, 1
        %s352 = smul.addr %s351, 2
        %s353 = smul.addr %s352, 8
        %s354 = scalar_lea.vmem %s2, %s353
      $region52: #{cross_attention_layer_forward.1} parent=39 // pred_fallthru
        _
      // Predicated region
      $region53: #{cross_attention_layer_forward.1} parent=39 // pred_check
        %p355 = pneg %p130
      $region54: #{cross_attention_layer_forward.1} parent=39 // pred_check_branch
        %357 = sbr.rel (%p355) target = $region56
      $region55: #{cross_attention_layer_forward.1} parent=39 // pred_region
        %p358 = scmp.lt.s32.totalorder %s23, 1
        %s359 = scalar_select %p358, %s23, 1
        %s360 = smul.addr %s359, 2
        %s361 = smul.addr %s360, 8
        %s362 = scalar_lea.vmem %s3, %s361
      $region56: #{cross_attention_layer_forward.1} parent=39 // pred_fallthru
        _
    $region40: #{cross_attention_layer_forward.1} parent=5 // pred_fallthru
      _
    %p363 = scmp.le.s32.totalorder 1, %s16
    %p364 = scmp.lt.s32.totalorder %s16, 3
    %p365 = pnand %p363, %p364
    %p366 = pneg %p365
    // Predicated region
    $region57: #{cross_attention_layer_forward.1} parent=5 // pred_check
      _
    $region58: #{cross_attention_layer_forward.1} parent=5 // pred_check_branch
      %368 = sbr.rel (%p365) target = $region60
    $region59: #{cross_attention_layer_forward.1} parent=5 // pred_region
      %s369 = ssub.s32 %s16, 1
      %p370 = scmp.lt.s32.totalorder %s25, 1
      %s371 = scalar_select %p370, %s25, 1
      %p372 = scmp.lt.s32.totalorder %s26, 0
      %s373 = scalar_select %p372, %s26, 0
      %s374 = sadd.s32 %s373, %s371
      %s375 = smul.addr %s374, 8
      %s376 = scalar_lea.vmem %s0, %s375
      %p377 = pneg %p56
      %p378 = pneg %p53
      %p379 = scmp.lt.s32.totalorder %s25, 1
      %s380 = scalar_select %p379, %s25, 1
      %p381 = scmp.lt.s32.totalorder %s26, 0
      %s382 = scalar_select %p381, %s26, 0
      %s383 = sadd.s32 %s382, %s380
      %s384 = smul.addr %s383, 8
      %s385 = scalar_lea.vmem %s1, %s384
      %p386 = pneg %p84
      %p387 = pneg %p81
      %p388 = scmp.lt.s32.totalorder %s25, 1
      %s389 = scalar_select %p388, %s25, 1
      %s390 = smul.addr %s389, 2
      %s391 = smul.addr %s390, 8
      %s392 = scalar_lea.vmem %s2, %s391
      %p393 = pneg %p110
      %p394 = pneg %p107
      %p395 = scmp.lt.s32.totalorder %s25, 1
      %s396 = scalar_select %p395, %s25, 1
      %s397 = smul.addr %s396, 2
      %s398 = smul.addr %s397, 8
      %s399 = scalar_lea.vmem %s3, %s398
      %p400 = pneg %p136
      %p401 = pneg %p133
      %p402 = pneg %p157
      %p403 = pneg %p154
      %p404 = pneg %p178
      %p405 = pneg %p175
      %p406 = pneg %p199
      %p407 = pneg %p196
      %p408 = pneg %p220
      %p409 = pneg %p217
      %p410 = pneg %p241
      %p411 = pneg %p238
      %p412 = pneg %p262
      %p413 = pneg %p259
      %p414 = pneg %p290
      %p415 = pneg %p287
      %p416 = scmp.lt.s32.totalorder %s25, 1
      %s417 = scalar_select %p416, %s25, 1
      %p418 = scmp.lt.s32.totalorder %s26, 0
      %s419 = scalar_select %p418, %s26, 0
      %s420 = sadd.s32 %s419, %s417
      %s421 = smul.addr %s420, 8
      %s422 = scalar_lea.vmem %s10, %s421
      %p423 = scmp.lt.s32.totalorder %s25, 1
      %s424 = scalar_select %p423, %s25, 1
      %p425 = scmp.lt.s32.totalorder %s26, 0
      %s426 = scalar_select %p425, %s26, 0
      %s427 = sadd.s32 %s426, %s424
      %s428 = smul.addr %s427, 8
      %s429 = scalar_lea.vmem %s0, %s428
      %p430 = scmp.lt.s32.totalorder %s25, 1
      %s431 = scalar_select %p430, %s25, 1
      %p432 = scmp.lt.s32.totalorder %s26, 0
      %s433 = scalar_select %p432, %s26, 0
      %s434 = sadd.s32 %s433, %s431
      %s435 = smul.addr %s434, 8
      %s436 = scalar_lea.vmem %s1, %s435
      %p437 = scmp.lt.s32.totalorder %s25, 1
      %s438 = scalar_select %p437, %s25, 1
      %s439 = smul.addr %s438, 2
      %s440 = smul.addr %s439, 8
      %s441 = scalar_lea.vmem %s2, %s440
      %p442 = scmp.lt.s32.totalorder %s25, 1
      %s443 = scalar_select %p442, %s25, 1
      %s444 = smul.addr %s443, 2
      %s445 = smul.addr %s444, 8
      %s446 = scalar_lea.vmem %s3, %s445
      %p447 = scmp.lt.s32.totalorder %s25, 1
      %s448 = scalar_select %p447, %s25, 1
      %p449 = scmp.lt.s32.totalorder %s26, 0
      %s450 = scalar_select %p449, %s26, 0
      %s451 = sadd.s32 %s450, %s448
      %s452 = smul.addr %s451, 8
      %s453 = scalar_lea.vmem %s10, %s452
      %v454 = vld [vmem:[%s429] sm:$0xff]
      %v455 = vld [vmem:[%s436] sm:$0xff]
      %v456 = vadd.f32 %v454, %v455
      %v457 = vld [vmem:[%s441] sm:$0xff]
      %v458 = vld [vmem:[%s441 + $0x8] sm:$0xf]
      %v459 = vld [vmem:[%s446] sm:$0xff]
      %v460 = vld [vmem:[%s446 + $0x8] sm:$0xf]
      %v461 = vadd.f32 %v457, %v459
      %v462 = vadd.f32 %v458, %v460
      %v463 = vld [vmem:[%s4] sm:$0xff]
      %v464 = vld [vmem:[%s5] sm:$0x1]
      %v466 = vlaneseq
      %v467 = vshrl.u32 %v466, 7
      %v468 = vsub.s32 0, %v467
      %v469 = vrot.slane %v464, %v468
      %vm471 = vcmask 261120
      %v473 = vsel %vm471, %v456, 0
      %v476 = vsel %vm471, %v463, 0
      %478 = vmatprep.subr.mxu0 0.0
      %479 = vmatpush1.xpose.msra.mxu0 0.0
      %480 = vmatprep.subr.mxu0 0.0
      %481 = vmatpush1.xpose.msra.mxu0 0.0
      %482 = vmatprep.subr.mxu0 0.0
      %483 = vmatpush1.xpose.msra.mxu0 0.0
      %484 = vmatprep.subr.mxu0 0.0
      %485 = vmatpush1.xpose.msra.mxu0 0.0
      %486 = vmatprep.subr.mxu0 0.0
      %487 = vmatpush1.xpose.msra.mxu0 0.0
      %488 = vmatprep.subr.mxu0 0.0
      %489 = vmatpush1.xpose.msra.mxu0 0.0
      %490 = vmatprep.subr.mxu0 0.0
      %491 = vmatpush1.xpose.msra.mxu0 0.0
      %492 = vmatprep.subr.mxu0 0.0
      %493 = vmatpush1.xpose.msra.mxu0 0.0
      %494 = vmatprep.subr.mxu0 0.0
      %495 = vmatpush1.xpose.msra.mxu0 0.0
      %496 = vmatprep.subr.mxu0 0.0
      %497 = vmatpush1.xpose.msra.mxu0 0.0
      %498 = vmatprep.subr.mxu0 0.0
      %499 = vmatpush1.xpose.msra.mxu0 0.0
      %500 = vmatprep.subr.mxu0 0.0
      %501 = vmatpush1.xpose.msra.mxu0 0.0
      %502 = vmatprep.subr.mxu0 0.0
      %503 = vmatpush1.xpose.msra.mxu0 0.0
      %504 = vmatprep.subr.mxu0 0.0
      %505 = vmatpush1.xpose.msra.mxu0 0.0
      %506 = vmatprep.subr.mxu0 0.0
      %507 = vmatpush1.xpose.msra.mxu0 0.0
      %508 = vmatprep.subr.mxu0 0.0
      %509 = vmatpush1.xpose.msra.mxu0 %v476
      %510 = vmatprep.subr.mxu0 0.0
      %511 = vmatpush2.xpose.msra.mxu0 0.0
      %512 = vmatprep.subr.mxu0 0.0
      %513 = vmatpush2.xpose.msra.mxu0 0.0
      %514 = vmatprep.subr.mxu0 0.0
      %515 = vmatpush2.xpose.msra.mxu0 0.0
      %516 = vmatprep.subr.mxu0 0.0
      %517 = vmatpush2.xpose.msra.mxu0 0.0
      %518 = vmatprep.subr.mxu0 0.0
      %519 = vmatpush2.xpose.msra.mxu0 0.0
      %520 = vmatprep.subr.mxu0 0.0
      %521 = vmatpush2.xpose.msra.mxu0 0.0
      %522 = vmatprep.subr.mxu0 0.0
      %523 = vmatpush2.xpose.msra.mxu0 0.0
      %524 = vmatprep.subr.mxu0 0.0
      %525 = vmatpush2.xpose.msra.mxu0 0.0
      %526 = vmatprep.subr.mxu0 0.0
      %527 = vmatpush2.xpose.msra.mxu0 0.0
      %528 = vmatprep.subr.mxu0 0.0
      %529 = vmatpush2.xpose.msra.mxu0 0.0
      %530 = vmatprep.subr.mxu0 0.0
      %531 = vmatpush2.xpose.msra.mxu0 0.0
      %532 = vmatprep.subr.mxu0 0.0
      %533 = vmatpush2.xpose.msra.mxu0 0.0
      %534 = vmatprep.subr.mxu0 0.0
      %535 = vmatpush2.xpose.msra.mxu0 0.0
      %536 = vmatprep.subr.mxu0 0.0
      %537 = vmatpush2.xpose.msra.mxu0 0.0
      %538 = vmatprep.subr.mxu0 0.0
      %539 = vmatpush2.xpose.msra.mxu0 0.0
      %540 = vmatprep.subr.mxu0 0.0
      %541 = vmatpush2.xpose.msra.mxu0 0.0
      %542 = vmatprep.mubr.f32.mxu0 0.0
      %543 = vmatmul.mubr.f32.gmra.mxu0 %v473
      %v544 = vpop.f32.mrf.mxu0
      %v545 = vadd.f32 %v469, %v544
      %v546 = vpop.f32.mrf.mxu0
      %547 = vdwg.mxu0
      %v548 = vmul.f32 %v545, 0.35355338
      %s549 = scalar_lea.vmem %s4, 32
      %v550 = vld [vmem:[%s549] sm:$0xff]
      %s551 = scalar_lea.vmem %s5, 4
      %v552 = vld [vmem:[%s551] sm:$0x1]
      %v554 = vlaneseq
      %v555 = vshrl.u32 %v554, 7
      %v556 = vsub.s32 0, %v555
      %v557 = vrot.slane %v552, %v556
      %v560 = vsel %vm471, %v461, 0
      %v563 = vsel %vm471, %v462, 0
      %v566 = vsel %vm471, %v550, 0
      %568 = vmatprep.subr.mxu0 0.0
      %569 = vmatpush1.xpose.msra.mxu0 0.0
      %570 = vmatprep.subr.mxu0 0.0
      %571 = vmatpush1.xpose.msra.mxu0 0.0
      %572 = vmatprep.subr.mxu0 0.0
      %573 = vmatpush1.xpose.msra.mxu0 0.0
      %574 = vmatprep.subr.mxu0 0.0
      %575 = vmatpush1.xpose.msra.mxu0 0.0
      %576 = vmatprep.subr.mxu0 0.0
      %577 = vmatpush1.xpose.msra.mxu0 0.0
      %578 = vmatprep.subr.mxu0 0.0
      %579 = vmatpush1.xpose.msra.mxu0 0.0
      %580 = vmatprep.subr.mxu0 0.0
      %581 = vmatpush1.xpose.msra.mxu0 0.0
      %582 = vmatprep.subr.mxu0 0.0
      %583 = vmatpush1.xpose.msra.mxu0 0.0
      %584 = vmatprep.subr.mxu0 0.0
      %585 = vmatpush1.xpose.msra.mxu0 0.0
      %586 = vmatprep.subr.mxu0 0.0
      %587 = vmatpush1.xpose.msra.mxu0 0.0
      %588 = vmatprep.subr.mxu0 0.0
      %589 = vmatpush1.xpose.msra.mxu0 0.0
      %590 = vmatprep.subr.mxu0 0.0
      %591 = vmatpush1.xpose.msra.mxu0 0.0
      %592 = vmatprep.subr.mxu0 0.0
      %593 = vmatpush1.xpose.msra.mxu0 0.0
      %594 = vmatprep.subr.mxu0 0.0
      %595 = vmatpush1.xpose.msra.mxu0 0.0
      %596 = vmatprep.subr.mxu0 0.0
      %597 = vmatpush1.xpose.msra.mxu0 0.0
      %598 = vmatprep.subr.mxu0 0.0
      %599 = vmatpush1.xpose.msra.mxu0 %v566
      %600 = vmatprep.subr.mxu0 0.0
      %601 = vmatpush2.xpose.msra.mxu0 0.0
      %602 = vmatprep.subr.mxu0 0.0
      %603 = vmatpush2.xpose.msra.mxu0 0.0
      %604 = vmatprep.subr.mxu0 0.0
      %605 = vmatpush2.xpose.msra.mxu0 0.0
      %606 = vmatprep.subr.mxu0 0.0
      %607 = vmatpush2.xpose.msra.mxu0 0.0
      %608 = vmatprep.subr.mxu0 0.0
      %609 = vmatpush2.xpose.msra.mxu0 0.0
      %610 = vmatprep.subr.mxu0 0.0
      %611 = vmatpush2.xpose.msra.mxu0 0.0
      %612 = vmatprep.subr.mxu0 0.0
      %613 = vmatpush2.xpose.msra.mxu0 0.0
      %614 = vmatprep.subr.mxu0 0.0
      %615 = vmatpush2.xpose.msra.mxu0 0.0
      %616 = vmatprep.subr.mxu0 0.0
      %617 = vmatpush2.xpose.msra.mxu0 0.0
      %618 = vmatprep.subr.mxu0 0.0
      %619 = vmatpush2.xpose.msra.mxu0 0.0
      %620 = vmatprep.subr.mxu0 0.0
      %621 = vmatpush2.xpose.msra.mxu0 0.0
      %622 = vmatprep.subr.mxu0 0.0
      %623 = vmatpush2.xpose.msra.mxu0 0.0
      %624 = vmatprep.subr.mxu0 0.0
      %625 = vmatpush2.xpose.msra.mxu0 0.0
      %626 = vmatprep.subr.mxu0 0.0
      %627 = vmatpush2.xpose.msra.mxu0 0.0
      %628 = vmatprep.subr.mxu0 0.0
      %629 = vmatpush2.xpose.msra.mxu0 0.0
      %630 = vmatprep.subr.mxu0 0.0
      %631 = vmatpush2.xpose.msra.mxu0 0.0
      %632 = vmatprep.mubr.f32.mxu0 0.0
      %633 = vmatmul.mubr.f32.gmra.mxu0 %v560
      %v634 = vpop.f32.mrf.mxu0
      %v635 = vadd.f32 %v557, %v634
      %v636 = vpop.f32.mrf.mxu0
      %637 = vmatprep.mubr.f32.mxu0 0.0
      %638 = vmatmul.mubr.f32.gmra.mxu0 %v563
      %v639 = vpop.f32.mrf.mxu0
      %v640 = vadd.f32 %v557, %v639
      %v641 = vpop.f32.mrf.mxu0
      %642 = vdwg.mxu0
      %s643 = scalar_lea.vmem %s4, 64
      %v644 = vld [vmem:[%s643] sm:$0xff]
      %s645 = scalar_lea.vmem %s5, 8
      %v646 = vld [vmem:[%s645] sm:$0x1]
      %v648 = vlaneseq
      %v649 = vshrl.u32 %v648, 7
      %v650 = vsub.s32 0, %v649
      %v651 = vrot.slane %v646, %v650
      %v654 = vsel %vm471, %v457, 0
      %v657 = vsel %vm471, %v458, 0
      %v660 = vsel %vm471, %v644, 0
      %662 = vmatprep.subr.mxu0 0.0
      %663 = vmatpush1.xpose.msra.mxu0 0.0
      %664 = vmatprep.subr.mxu0 0.0
      %665 = vmatpush1.xpose.msra.mxu0 0.0
      %666 = vmatprep.subr.mxu0 0.0
      %667 = vmatpush1.xpose.msra.mxu0 0.0
      %668 = vmatprep.subr.mxu0 0.0
      %669 = vmatpush1.xpose.msra.mxu0 0.0
      %670 = vmatprep.subr.mxu0 0.0
      %671 = vmatpush1.xpose.msra.mxu0 0.0
      %672 = vmatprep.subr.mxu0 0.0
      %673 = vmatpush1.xpose.msra.mxu0 0.0
      %674 = vmatprep.subr.mxu0 0.0
      %675 = vmatpush1.xpose.msra.mxu0 0.0
      %676 = vmatprep.subr.mxu0 0.0
      %677 = vmatpush1.xpose.msra.mxu0 0.0
      %678 = vmatprep.subr.mxu0 0.0
      %679 = vmatpush1.xpose.msra.mxu0 0.0
      %680 = vmatprep.subr.mxu0 0.0
      %681 = vmatpush1.xpose.msra.mxu0 0.0
      %682 = vmatprep.subr.mxu0 0.0
      %683 = vmatpush1.xpose.msra.mxu0 0.0
      %684 = vmatprep.subr.mxu0 0.0
      %685 = vmatpush1.xpose.msra.mxu0 0.0
      %686 = vmatprep.subr.mxu0 0.0
      %687 = vmatpush1.xpose.msra.mxu0 0.0
      %688 = vmatprep.subr.mxu0 0.0
      %689 = vmatpush1.xpose.msra.mxu0 0.0
      %690 = vmatprep.subr.mxu0 0.0
      %691 = vmatpush1.xpose.msra.mxu0 0.0
      %692 = vmatprep.subr.mxu0 0.0
      %693 = vmatpush1.xpose.msra.mxu0 %v660
      %694 = vmatprep.subr.mxu0 0.0
      %695 = vmatpush2.xpose.msra.mxu0 0.0
      %696 = vmatprep.subr.mxu0 0.0
      %697 = vmatpush2.xpose.msra.mxu0 0.0
      %698 = vmatprep.subr.mxu0 0.0
      %699 = vmatpush2.xpose.msra.mxu0 0.0
      %700 = vmatprep.subr.mxu0 0.0
      %701 = vmatpush2.xpose.msra.mxu0 0.0
      %702 = vmatprep.subr.mxu0 0.0
      %703 = vmatpush2.xpose.msra.mxu0 0.0
      %704 = vmatprep.subr.mxu0 0.0
      %705 = vmatpush2.xpose.msra.mxu0 0.0
      %706 = vmatprep.subr.mxu0 0.0
      %707 = vmatpush2.xpose.msra.mxu0 0.0
      %708 = vmatprep.subr.mxu0 0.0
      %709 = vmatpush2.xpose.msra.mxu0 0.0
      %710 = vmatprep.subr.mxu0 0.0
      %711 = vmatpush2.xpose.msra.mxu0 0.0
      %712 = vmatprep.subr.mxu0 0.0
      %713 = vmatpush2.xpose.msra.mxu0 0.0
      %714 = vmatprep.subr.mxu0 0.0
      %715 = vmatpush2.xpose.msra.mxu0 0.0
      %716 = vmatprep.subr.mxu0 0.0
      %717 = vmatpush2.xpose.msra.mxu0 0.0
      %718 = vmatprep.subr.mxu0 0.0
      %719 = vmatpush2.xpose.msra.mxu0 0.0
      %720 = vmatprep.subr.mxu0 0.0
      %721 = vmatpush2.xpose.msra.mxu0 0.0
      %722 = vmatprep.subr.mxu0 0.0
      %723 = vmatpush2.xpose.msra.mxu0 0.0
      %724 = vmatprep.subr.mxu0 0.0
      %725 = vmatpush2.xpose.msra.mxu0 0.0
      %726 = vmatprep.mubr.f32.mxu0 0.0
      %727 = vmatmul.mubr.f32.gmra.mxu0 %v654
      %v728 = vpop.f32.mrf.mxu0
      %v729 = vadd.f32 %v651, %v728
      %v730 = vpop.f32.mrf.mxu0
      %731 = vmatprep.mubr.f32.mxu0 0.0
      %732 = vmatmul.mubr.f32.gmra.mxu0 %v657
      %v733 = vpop.f32.mrf.mxu0
      %v734 = vadd.f32 %v651, %v733
      %v735 = vpop.f32.mrf.mxu0
      %736 = vdwg.mxu0
      %vm737 = vcmask 64512
      %v739 = vsel %vm737, %v548, 0
      %v742 = vsel %vm737, %v635, 0
      %v745 = vsel %vm737, %v640, 0
      %747 = vmatprep.subr.mxu0 0.0
      %748 = vmatpush1.xpose.msra.mxu0 0.0
      %749 = vmatprep.subr.mxu0 0.0
      %750 = vmatpush1.xpose.msra.mxu0 0.0
      %751 = vmatprep.subr.mxu0 0.0
      %752 = vmatpush1.xpose.msra.mxu0 0.0
      %753 = vmatprep.subr.mxu0 0.0
      %754 = vmatpush1.xpose.msra.mxu0 0.0
      %755 = vmatprep.subr.mxu0 0.0
      %756 = vmatpush1.xpose.msra.mxu0 0.0
      %757 = vmatprep.subr.mxu0 0.0
      %758 = vmatpush1.xpose.msra.mxu0 0.0
      %759 = vmatprep.subr.mxu0 0.0
      %760 = vmatpush1.xpose.msra.mxu0 0.0
      %761 = vmatprep.subr.mxu0 0.0
      %762 = vmatpush1.xpose.msra.mxu0 0.0
      %763 = vmatprep.subr.mxu0 0.0
      %764 = vmatpush1.xpose.msra.mxu0 0.0
      %765 = vmatprep.subr.mxu0 0.0
      %766 = vmatpush1.xpose.msra.mxu0 0.0
      %767 = vmatprep.subr.mxu0 0.0
      %768 = vmatpush1.xpose.msra.mxu0 0.0
      %769 = vmatprep.subr.mxu0 0.0
      %770 = vmatpush1.xpose.msra.mxu0 0.0
      %771 = vmatprep.subr.mxu0 0.0
      %772 = vmatpush1.xpose.msra.mxu0 0.0
      %773 = vmatprep.subr.mxu0 0.0
      %774 = vmatpush1.xpose.msra.mxu0 0.0
      %775 = vmatprep.subr.mxu0 0.0
      %776 = vmatpush1.xpose.msra.mxu0 %v745
      %777 = vmatprep.subr.mxu0 0.0
      %778 = vmatpush1.xpose.msra.mxu0 %v742
      %779 = vmatprep.subr.mxu0 0.0
      %780 = vmatpush2.xpose.msra.mxu0 0.0
      %781 = vmatprep.subr.mxu0 0.0
      %782 = vmatpush2.xpose.msra.mxu0 0.0
      %783 = vmatprep.subr.mxu0 0.0
      %784 = vmatpush2.xpose.msra.mxu0 0.0
      %785 = vmatprep.subr.mxu0 0.0
      %786 = vmatpush2.xpose.msra.mxu0 0.0
      %787 = vmatprep.subr.mxu0 0.0
      %788 = vmatpush2.xpose.msra.mxu0 0.0
      %789 = vmatprep.subr.mxu0 0.0
      %790 = vmatpush2.xpose.msra.mxu0 0.0
      %791 = vmatprep.subr.mxu0 0.0
      %792 = vmatpush2.xpose.msra.mxu0 0.0
      %793 = vmatprep.subr.mxu0 0.0
      %794 = vmatpush2.xpose.msra.mxu0 0.0
      %795 = vmatprep.subr.mxu0 0.0
      %796 = vmatpush2.xpose.msra.mxu0 0.0
      %797 = vmatprep.subr.mxu0 0.0
      %798 = vmatpush2.xpose.msra.mxu0 0.0
      %799 = vmatprep.subr.mxu0 0.0
      %800 = vmatpush2.xpose.msra.mxu0 0.0
      %801 = vmatprep.subr.mxu0 0.0
      %802 = vmatpush2.xpose.msra.mxu0 0.0
      %803 = vmatprep.subr.mxu0 0.0
      %804 = vmatpush2.xpose.msra.mxu0 0.0
      %805 = vmatprep.subr.mxu0 0.0
      %806 = vmatpush2.xpose.msra.mxu0 0.0
      %807 = vmatprep.subr.mxu0 0.0
      %808 = vmatpush2.xpose.msra.mxu0 0.0
      %809 = vmatprep.subr.mxu0 0.0
      %810 = vmatpush2.xpose.msra.mxu0 0.0
      %811 = vmatprep.mubr.f32.mxu0 0.0
      %812 = vmatmul.mubr.f32.gmra.mxu0 %v739
      %v813 = vpop.f32.mrf.mxu0
      %v814 = vadd.f32 0.0, %v813
      %v815 = vpop.f32.mrf.mxu0
      %816 = vdwg.mxu0
      %vm817 = vcmask 97280
      %v818 = vsel %vm817, %v814, -inf
      %819 = vmax.xlane.f32.xlu0 %v818
      %v820 = vpop.xlane.xlu0 %819
      %v821 = vsub.f32 %v814, %v820
      %v822 = vmul.f32 %v821, 1.442695
      %v823 = vpow.pop %v822
      %v824 = vsel %vm817, %v823, 0.0
      %825 = vadd.xlane.f32.xlu0 %v824
      %v826 = vpop.xlane.xlu0 %825
      %v828 = vsel %vm817, %v823, 0
      %vm830 = vcmask 1043456
      %v832 = vsel %vm830, %v734, 0
      %834 = vmatprep.subr.mxu0 0.0
      %835 = vmatpush1.msra.mxu0 0.0
      %836 = vmatprep.subr.mxu0 0.0
      %837 = vmatpush1.msra.mxu0 0.0
      %838 = vmatprep.subr.mxu0 0.0
      %839 = vmatpush1.msra.mxu0 0.0
      %840 = vmatprep.subr.mxu0 0.0
      %841 = vmatpush1.msra.mxu0 0.0
      %842 = vmatprep.subr.mxu0 0.0
      %843 = vmatpush1.msra.mxu0 0.0
      %844 = vmatprep.subr.mxu0 0.0
      %845 = vmatpush1.msra.mxu0 0.0
      %846 = vmatprep.subr.mxu0 0.0
      %847 = vmatpush1.msra.mxu0 0.0
      %848 = vmatprep.subr.mxu0 0.0
      %849 = vmatpush1.msra.mxu0 0.0
      %850 = vmatprep.subr.mxu0 0.0
      %851 = vmatpush1.msra.mxu0 0.0
      %852 = vmatprep.subr.mxu0 0.0
      %853 = vmatpush1.msra.mxu0 0.0
      %854 = vmatprep.subr.mxu0 0.0
      %855 = vmatpush1.msra.mxu0 0.0
      %856 = vmatprep.subr.mxu0 0.0
      %857 = vmatpush1.msra.mxu0 0.0
      %858 = vmatprep.subr.mxu0 0.0
      %859 = vmatpush1.msra.mxu0 0.0
      %860 = vmatprep.subr.mxu0 0.0
      %861 = vmatpush1.msra.mxu0 0.0
      %862 = vmatprep.subr.mxu0 0.0
      %863 = vmatpush1.msra.mxu0 %v832
      %864 = vmatprep.subr.mxu0 0.0
      %865 = vmatpush1.msra.mxu0 %v729
      %866 = vmatprep.subr.mxu0 0.0
      %867 = vmatpush2.msra.mxu0 0.0
      %868 = vmatprep.subr.mxu0 0.0
      %869 = vmatpush2.msra.mxu0 0.0
      %870 = vmatprep.subr.mxu0 0.0
      %871 = vmatpush2.msra.mxu0 0.0
      %872 = vmatprep.subr.mxu0 0.0
      %873 = vmatpush2.msra.mxu0 0.0
      %874 = vmatprep.subr.mxu0 0.0
      %875 = vmatpush2.msra.mxu0 0.0
      %876 = vmatprep.subr.mxu0 0.0
      %877 = vmatpush2.msra.mxu0 0.0
      %878 = vmatprep.subr.mxu0 0.0
      %879 = vmatpush2.msra.mxu0 0.0
      %880 = vmatprep.subr.mxu0 0.0
      %881 = vmatpush2.msra.mxu0 0.0
      %882 = vmatprep.subr.mxu0 0.0
      %883 = vmatpush2.msra.mxu0 0.0
      %884 = vmatprep.subr.mxu0 0.0
      %885 = vmatpush2.msra.mxu0 0.0
      %886 = vmatprep.subr.mxu0 0.0
      %887 = vmatpush2.msra.mxu0 0.0
      %888 = vmatprep.subr.mxu0 0.0
      %889 = vmatpush2.msra.mxu0 0.0
      %890 = vmatprep.subr.mxu0 0.0
      %891 = vmatpush2.msra.mxu0 0.0
      %892 = vmatprep.subr.mxu0 0.0
      %893 = vmatpush2.msra.mxu0 0.0
      %894 = vmatprep.subr.mxu0 0.0
      %895 = vmatpush2.msra.mxu0 0.0
      %896 = vmatprep.subr.mxu0 0.0
      %897 = vmatpush2.msra.mxu0 0.0
      %898 = vmatprep.mubr.f32.mxu0 0.0
      %899 = vmatmul.mubr.f32.gmra.mxu0 %v828
      %v900 = vpop.f32.mrf.mxu0
      %v901 = vadd.f32 0.0, %v900
      %v902 = vpop.f32.mrf.mxu0
      %903 = vdwg.mxu0
      %v904 = vrcp.pop %v826
      %v905 = vmul.f32 %v901, %v904
      %s906 = scalar_lea.vmem %s4, 8
      %v907 = vld [vmem:[%s906] sm:$0xff]
      %s908 = scalar_lea.vmem %s5, 1
      %v909 = vld [vmem:[%s908] sm:$0x1]
      %v911 = vlaneseq
      %v912 = vshrl.u32 %v911, 7
      %v913 = vsub.s32 0, %v912
      %v914 = vrot.slane %v909, %v913
      %v917 = vsel %vm471, %v907, 0
      %919 = vmatprep.subr.mxu0 0.0
      %920 = vmatpush1.xpose.msra.mxu0 0.0
      %921 = vmatprep.subr.mxu0 0.0
      %922 = vmatpush1.xpose.msra.mxu0 0.0
      %923 = vmatprep.subr.mxu0 0.0
      %924 = vmatpush1.xpose.msra.mxu0 0.0
      %925 = vmatprep.subr.mxu0 0.0
      %926 = vmatpush1.xpose.msra.mxu0 0.0
      %927 = vmatprep.subr.mxu0 0.0
      %928 = vmatpush1.xpose.msra.mxu0 0.0
      %929 = vmatprep.subr.mxu0 0.0
      %930 = vmatpush1.xpose.msra.mxu0 0.0
      %931 = vmatprep.subr.mxu0 0.0
      %932 = vmatpush1.xpose.msra.mxu0 0.0
      %933 = vmatprep.subr.mxu0 0.0
      %934 = vmatpush1.xpose.msra.mxu0 0.0
      %935 = vmatprep.subr.mxu0 0.0
      %936 = vmatpush1.xpose.msra.mxu0 0.0
      %937 = vmatprep.subr.mxu0 0.0
      %938 = vmatpush1.xpose.msra.mxu0 0.0
      %939 = vmatprep.subr.mxu0 0.0
      %940 = vmatpush1.xpose.msra.mxu0 0.0
      %941 = vmatprep.subr.mxu0 0.0
      %942 = vmatpush1.xpose.msra.mxu0 0.0
      %943 = vmatprep.subr.mxu0 0.0
      %944 = vmatpush1.xpose.msra.mxu0 0.0
      %945 = vmatprep.subr.mxu0 0.0
      %946 = vmatpush1.xpose.msra.mxu0 0.0
      %947 = vmatprep.subr.mxu0 0.0
      %948 = vmatpush1.xpose.msra.mxu0 0.0
      %949 = vmatprep.subr.mxu0 0.0
      %950 = vmatpush1.xpose.msra.mxu0 %v917
      %951 = vmatprep.subr.mxu0 0.0
      %952 = vmatpush2.xpose.msra.mxu0 0.0
      %953 = vmatprep.subr.mxu0 0.0
      %954 = vmatpush2.xpose.msra.mxu0 0.0
      %955 = vmatprep.subr.mxu0 0.0
      %956 = vmatpush2.xpose.msra.mxu0 0.0
      %957 = vmatprep.subr.mxu0 0.0
      %958 = vmatpush2.xpose.msra.mxu0 0.0
      %959 = vmatprep.subr.mxu0 0.0
      %960 = vmatpush2.xpose.msra.mxu0 0.0
      %961 = vmatprep.subr.mxu0 0.0
      %962 = vmatpush2.xpose.msra.mxu0 0.0
      %963 = vmatprep.subr.mxu0 0.0
      %964 = vmatpush2.xpose.msra.mxu0 0.0
      %965 = vmatprep.subr.mxu0 0.0
      %966 = vmatpush2.xpose.msra.mxu0 0.0
      %967 = vmatprep.subr.mxu0 0.0
      %968 = vmatpush2.xpose.msra.mxu0 0.0
      %969 = vmatprep.subr.mxu0 0.0
      %970 = vmatpush2.xpose.msra.mxu0 0.0
      %971 = vmatprep.subr.mxu0 0.0
      %972 = vmatpush2.xpose.msra.mxu0 0.0
      %973 = vmatprep.subr.mxu0 0.0
      %974 = vmatpush2.xpose.msra.mxu0 0.0
      %975 = vmatprep.subr.mxu0 0.0
      %976 = vmatpush2.xpose.msra.mxu0 0.0
      %977 = vmatprep.subr.mxu0 0.0
      %978 = vmatpush2.xpose.msra.mxu0 0.0
      %979 = vmatprep.subr.mxu0 0.0
      %980 = vmatpush2.xpose.msra.mxu0 0.0
      %981 = vmatprep.subr.mxu0 0.0
      %982 = vmatpush2.xpose.msra.mxu0 0.0
      %983 = vmatprep.mubr.f32.mxu0 0.0
      %984 = vmatmul.mubr.f32.gmra.mxu0 %v473
      %v985 = vpop.f32.mrf.mxu0
      %v986 = vadd.f32 %v914, %v985
      %v987 = vpop.f32.mrf.mxu0
      %988 = vdwg.mxu0
      %v989 = vmul.f32 %v986, 0.35355338
      %s990 = scalar_lea.vmem %s4, 40
      %v991 = vld [vmem:[%s990] sm:$0xff]
      %s992 = scalar_lea.vmem %s5, 5
      %v993 = vld [vmem:[%s992] sm:$0x1]
      %v995 = vlaneseq
      %v996 = vshrl.u32 %v995, 7
      %v997 = vsub.s32 0, %v996
      %v998 = vrot.slane %v993, %v997
      %v1001 = vsel %vm471, %v991, 0
      %1003 = vmatprep.subr.mxu0 0.0
      %1004 = vmatpush1.xpose.msra.mxu0 0.0
      %1005 = vmatprep.subr.mxu0 0.0
      %1006 = vmatpush1.xpose.msra.mxu0 0.0
      %1007 = vmatprep.subr.mxu0 0.0
      %1008 = vmatpush1.xpose.msra.mxu0 0.0
      %1009 = vmatprep.subr.mxu0 0.0
      %1010 = vmatpush1.xpose.msra.mxu0 0.0
      %1011 = vmatprep.subr.mxu0 0.0
      %1012 = vmatpush1.xpose.msra.mxu0 0.0
      %1013 = vmatprep.subr.mxu0 0.0
      %1014 = vmatpush1.xpose.msra.mxu0 0.0
      %1015 = vmatprep.subr.mxu0 0.0
      %1016 = vmatpush1.xpose.msra.mxu0 0.0
      %1017 = vmatprep.subr.mxu0 0.0
      %1018 = vmatpush1.xpose.msra.mxu0 0.0
      %1019 = vmatprep.subr.mxu0 0.0
      %1020 = vmatpush1.xpose.msra.mxu0 0.0
      %1021 = vmatprep.subr.mxu0 0.0
      %1022 = vmatpush1.xpose.msra.mxu0 0.0
      %1023 = vmatprep.subr.mxu0 0.0
      %1024 = vmatpush1.xpose.msra.mxu0 0.0
      %1025 = vmatprep.subr.mxu0 0.0
      %1026 = vmatpush1.xpose.msra.mxu0 0.0
      %1027 = vmatprep.subr.mxu0 0.0
      %1028 = vmatpush1.xpose.msra.mxu0 0.0
      %1029 = vmatprep.subr.mxu0 0.0
      %1030 = vmatpush1.xpose.msra.mxu0 0.0
      %1031 = vmatprep.subr.mxu0 0.0
      %1032 = vmatpush1.xpose.msra.mxu0 0.0
      %1033 = vmatprep.subr.mxu0 0.0
      %1034 = vmatpush1.xpose.msra.mxu0 %v1001
      %1035 = vmatprep.subr.mxu0 0.0
      %1036 = vmatpush2.xpose.msra.mxu0 0.0
      %1037 = vmatprep.subr.mxu0 0.0
      %1038 = vmatpush2.xpose.msra.mxu0 0.0
      %1039 = vmatprep.subr.mxu0 0.0
      %1040 = vmatpush2.xpose.msra.mxu0 0.0
      %1041 = vmatprep.subr.mxu0 0.0
      %1042 = vmatpush2.xpose.msra.mxu0 0.0
      %1043 = vmatprep.subr.mxu0 0.0
      %1044 = vmatpush2.xpose.msra.mxu0 0.0
      %1045 = vmatprep.subr.mxu0 0.0
      %1046 = vmatpush2.xpose.msra.mxu0 0.0
      %1047 = vmatprep.subr.mxu0 0.0
      %1048 = vmatpush2.xpose.msra.mxu0 0.0
      %1049 = vmatprep.subr.mxu0 0.0
      %1050 = vmatpush2.xpose.msra.mxu0 0.0
      %1051 = vmatprep.subr.mxu0 0.0
      %1052 = vmatpush2.xpose.msra.mxu0 0.0
      %1053 = vmatprep.subr.mxu0 0.0
      %1054 = vmatpush2.xpose.msra.mxu0 0.0
      %1055 = vmatprep.subr.mxu0 0.0
      %1056 = vmatpush2.xpose.msra.mxu0 0.0
      %1057 = vmatprep.subr.mxu0 0.0
      %1058 = vmatpush2.xpose.msra.mxu0 0.0
      %1059 = vmatprep.subr.mxu0 0.0
      %1060 = vmatpush2.xpose.msra.mxu0 0.0
      %1061 = vmatprep.subr.mxu0 0.0
      %1062 = vmatpush2.xpose.msra.mxu0 0.0
      %1063 = vmatprep.subr.mxu0 0.0
      %1064 = vmatpush2.xpose.msra.mxu0 0.0
      %1065 = vmatprep.subr.mxu0 0.0
      %1066 = vmatpush2.xpose.msra.mxu0 0.0
      %1067 = vmatprep.mubr.f32.mxu0 0.0
      %1068 = vmatmul.mubr.f32.gmra.mxu0 %v560
      %v1069 = vpop.f32.mrf.mxu0
      %v1070 = vadd.f32 %v998, %v1069
      %v1071 = vpop.f32.mrf.mxu0
      %1072 = vmatprep.mubr.f32.mxu0 0.0
      %1073 = vmatmul.mubr.f32.gmra.mxu0 %v563
      %v1074 = vpop.f32.mrf.mxu0
      %v1075 = vadd.f32 %v998, %v1074
      %v1076 = vpop.f32.mrf.mxu0
      %1077 = vdwg.mxu0
      %s1078 = scalar_lea.vmem %s4, 72
      %v1079 = vld [vmem:[%s1078] sm:$0xff]
      %s1080 = scalar_lea.vmem %s5, 9
      %v1081 = vld [vmem:[%s1080] sm:$0x1]
      %v1083 = vlaneseq
      %v1084 = vshrl.u32 %v1083, 7
      %v1085 = vsub.s32 0, %v1084
      %v1086 = vrot.slane %v1081, %v1085
      %v1089 = vsel %vm471, %v1079, 0
      %1091 = vmatprep.subr.mxu0 0.0
      %1092 = vmatpush1.xpose.msra.mxu0 0.0
      %1093 = vmatprep.subr.mxu0 0.0
      %1094 = vmatpush1.xpose.msra.mxu0 0.0
      %1095 = vmatprep.subr.mxu0 0.0
      %1096 = vmatpush1.xpose.msra.mxu0 0.0
      %1097 = vmatprep.subr.mxu0 0.0
      %1098 = vmatpush1.xpose.msra.mxu0 0.0
      %1099 = vmatprep.subr.mxu0 0.0
      %1100 = vmatpush1.xpose.msra.mxu0 0.0
      %1101 = vmatprep.subr.mxu0 0.0
      %1102 = vmatpush1.xpose.msra.mxu0 0.0
      %1103 = vmatprep.subr.mxu0 0.0
      %1104 = vmatpush1.xpose.msra.mxu0 0.0
      %1105 = vmatprep.subr.mxu0 0.0
      %1106 = vmatpush1.xpose.msra.mxu0 0.0
      %1107 = vmatprep.subr.mxu0 0.0
      %1108 = vmatpush1.xpose.msra.mxu0 0.0
      %1109 = vmatprep.subr.mxu0 0.0
      %1110 = vmatpush1.xpose.msra.mxu0 0.0
      %1111 = vmatprep.subr.mxu0 0.0
      %1112 = vmatpush1.xpose.msra.mxu0 0.0
      %1113 = vmatprep.subr.mxu0 0.0
      %1114 = vmatpush1.xpose.msra.mxu0 0.0
      %1115 = vmatprep.subr.mxu0 0.0
      %1116 = vmatpush1.xpose.msra.mxu0 0.0
      %1117 = vmatprep.subr.mxu0 0.0
      %1118 = vmatpush1.xpose.msra.mxu0 0.0
      %1119 = vmatprep.subr.mxu0 0.0
      %1120 = vmatpush1.xpose.msra.mxu0 0.0
      %1121 = vmatprep.subr.mxu0 0.0
      %1122 = vmatpush1.xpose.msra.mxu0 %v1089
      %1123 = vmatprep.subr.mxu0 0.0
      %1124 = vmatpush2.xpose.msra.mxu0 0.0
      %1125 = vmatprep.subr.mxu0 0.0
      %1126 = vmatpush2.xpose.msra.mxu0 0.0
      %1127 = vmatprep.subr.mxu0 0.0
      %1128 = vmatpush2.xpose.msra.mxu0 0.0
      %1129 = vmatprep.subr.mxu0 0.0
      %1130 = vmatpush2.xpose.msra.mxu0 0.0
      %1131 = vmatprep.subr.mxu0 0.0
      %1132 = vmatpush2.xpose.msra.mxu0 0.0
      %1133 = vmatprep.subr.mxu0 0.0
      %1134 = vmatpush2.xpose.msra.mxu0 0.0
      %1135 = vmatprep.subr.mxu0 0.0
      %1136 = vmatpush2.xpose.msra.mxu0 0.0
      %1137 = vmatprep.subr.mxu0 0.0
      %1138 = vmatpush2.xpose.msra.mxu0 0.0
      %1139 = vmatprep.subr.mxu0 0.0
      %1140 = vmatpush2.xpose.msra.mxu0 0.0
      %1141 = vmatprep.subr.mxu0 0.0
      %1142 = vmatpush2.xpose.msra.mxu0 0.0
      %1143 = vmatprep.subr.mxu0 0.0
      %1144 = vmatpush2.xpose.msra.mxu0 0.0
      %1145 = vmatprep.subr.mxu0 0.0
      %1146 = vmatpush2.xpose.msra.mxu0 0.0
      %1147 = vmatprep.subr.mxu0 0.0
      %1148 = vmatpush2.xpose.msra.mxu0 0.0
      %1149 = vmatprep.subr.mxu0 0.0
      %1150 = vmatpush2.xpose.msra.mxu0 0.0
      %1151 = vmatprep.subr.mxu0 0.0
      %1152 = vmatpush2.xpose.msra.mxu0 0.0
      %1153 = vmatprep.subr.mxu0 0.0
      %1154 = vmatpush2.xpose.msra.mxu0 0.0
      %1155 = vmatprep.mubr.f32.mxu0 0.0
      %1156 = vmatmul.mubr.f32.gmra.mxu0 %v654
      %v1157 = vpop.f32.mrf.mxu0
      %v1158 = vadd.f32 %v1086, %v1157
      %v1159 = vpop.f32.mrf.mxu0
      %1160 = vmatprep.mubr.f32.mxu0 0.0
      %1161 = vmatmul.mubr.f32.gmra.mxu0 %v657
      %v1162 = vpop.f32.mrf.mxu0
      %v1163 = vadd.f32 %v1086, %v1162
      %v1164 = vpop.f32.mrf.mxu0
      %1165 = vdwg.mxu0
      %v1167 = vsel %vm737, %v989, 0
      %v1170 = vsel %vm737, %v1070, 0
      %v1173 = vsel %vm737, %v1075, 0
      %1175 = vmatprep.subr.mxu0 0.0
      %1176 = vmatpush1.xpose.msra.mxu0 0.0
      %1177 = vmatprep.subr.mxu0 0.0
      %1178 = vmatpush1.xpose.msra.mxu0 0.0
      %1179 = vmatprep.subr.mxu0 0.0
      %1180 = vmatpush1.xpose.msra.mxu0 0.0
      %1181 = vmatprep.subr.mxu0 0.0
      %1182 = vmatpush1.xpose.msra.mxu0 0.0
      %1183 = vmatprep.subr.mxu0 0.0
      %1184 = vmatpush1.xpose.msra.mxu0 0.0
      %1185 = vmatprep.subr.mxu0 0.0
      %1186 = vmatpush1.xpose.msra.mxu0 0.0
      %1187 = vmatprep.subr.mxu0 0.0
      %1188 = vmatpush1.xpose.msra.mxu0 0.0
      %1189 = vmatprep.subr.mxu0 0.0
      %1190 = vmatpush1.xpose.msra.mxu0 0.0
      %1191 = vmatprep.subr.mxu0 0.0
      %1192 = vmatpush1.xpose.msra.mxu0 0.0
      %1193 = vmatprep.subr.mxu0 0.0
      %1194 = vmatpush1.xpose.msra.mxu0 0.0
      %1195 = vmatprep.subr.mxu0 0.0
      %1196 = vmatpush1.xpose.msra.mxu0 0.0
      %1197 = vmatprep.subr.mxu0 0.0
      %1198 = vmatpush1.xpose.msra.mxu0 0.0
      %1199 = vmatprep.subr.mxu0 0.0
      %1200 = vmatpush1.xpose.msra.mxu0 0.0
      %1201 = vmatprep.subr.mxu0 0.0
      %1202 = vmatpush1.xpose.msra.mxu0 0.0
      %1203 = vmatprep.subr.mxu0 0.0
      %1204 = vmatpush1.xpose.msra.mxu0 %v1173
      %1205 = vmatprep.subr.mxu0 0.0
      %1206 = vmatpush1.xpose.msra.mxu0 %v1170
      %1207 = vmatprep.subr.mxu0 0.0
      %1208 = vmatpush2.xpose.msra.mxu0 0.0
      %1209 = vmatprep.subr.mxu0 0.0
      %1210 = vmatpush2.xpose.msra.mxu0 0.0
      %1211 = vmatprep.subr.mxu0 0.0
      %1212 = vmatpush2.xpose.msra.mxu0 0.0
      %1213 = vmatprep.subr.mxu0 0.0
      %1214 = vmatpush2.xpose.msra.mxu0 0.0
      %1215 = vmatprep.subr.mxu0 0.0
      %1216 = vmatpush2.xpose.msra.mxu0 0.0
      %1217 = vmatprep.subr.mxu0 0.0
      %1218 = vmatpush2.xpose.msra.mxu0 0.0
      %1219 = vmatprep.subr.mxu0 0.0
      %1220 = vmatpush2.xpose.msra.mxu0 0.0
      %1221 = vmatprep.subr.mxu0 0.0
      %1222 = vmatpush2.xpose.msra.mxu0 0.0
      %1223 = vmatprep.subr.mxu0 0.0
      %1224 = vmatpush2.xpose.msra.mxu0 0.0
      %1225 = vmatprep.subr.mxu0 0.0
      %1226 = vmatpush2.xpose.msra.mxu0 0.0
      %1227 = vmatprep.subr.mxu0 0.0
      %1228 = vmatpush2.xpose.msra.mxu0 0.0
      %1229 = vmatprep.subr.mxu0 0.0
      %1230 = vmatpush2.xpose.msra.mxu0 0.0
      %1231 = vmatprep.subr.mxu0 0.0
      %1232 = vmatpush2.xpose.msra.mxu0 0.0
      %1233 = vmatprep.subr.mxu0 0.0
      %1234 = vmatpush2.xpose.msra.mxu0 0.0
      %1235 = vmatprep.subr.mxu0 0.0
      %1236 = vmatpush2.xpose.msra.mxu0 0.0
      %1237 = vmatprep.subr.mxu0 0.0
      %1238 = vmatpush2.xpose.msra.mxu0 0.0
      %1239 = vmatprep.mubr.f32.mxu0 0.0
      %1240 = vmatmul.mubr.f32.gmra.mxu0 %v1167
      %v1241 = vpop.f32.mrf.mxu0
      %v1242 = vadd.f32 0.0, %v1241
      %v1243 = vpop.f32.mrf.mxu0
      %1244 = vdwg.mxu0
      %v1245 = vsel %vm817, %v1242, -inf
      %1246 = vmax.xlane.f32.xlu0 %v1245
      %v1247 = vpop.xlane.xlu0 %1246
      %v1248 = vsub.f32 %v1242, %v1247
      %v1249 = vmul.f32 %v1248, 1.442695
      %v1250 = vpow.pop %v1249
      %v1251 = vsel %vm817, %v1250, 0.0
      %1252 = vadd.xlane.f32.xlu0 %v1251
      %v1253 = vpop.xlane.xlu0 %1252
      %v1255 = vsel %vm817, %v1250, 0
      %v1258 = vsel %vm830, %v1163, 0
      %1260 = vmatprep.subr.mxu0 0.0
      %1261 = vmatpush1.msra.mxu0 0.0
      %1262 = vmatprep.subr.mxu0 0.0
      %1263 = vmatpush1.msra.mxu0 0.0
      %1264 = vmatprep.subr.mxu0 0.0
      %1265 = vmatpush1.msra.mxu0 0.0
      %1266 = vmatprep.subr.mxu0 0.0
      %1267 = vmatpush1.msra.mxu0 0.0
      %1268 = vmatprep.subr.mxu0 0.0
      %1269 = vmatpush1.msra.mxu0 0.0
      %1270 = vmatprep.subr.mxu0 0.0
      %1271 = vmatpush1.msra.mxu0 0.0
      %1272 = vmatprep.subr.mxu0 0.0
      %1273 = vmatpush1.msra.mxu0 0.0
      %1274 = vmatprep.subr.mxu0 0.0
      %1275 = vmatpush1.msra.mxu0 0.0
      %1276 = vmatprep.subr.mxu0 0.0
      %1277 = vmatpush1.msra.mxu0 0.0
      %1278 = vmatprep.subr.mxu0 0.0
      %1279 = vmatpush1.msra.mxu0 0.0
      %1280 = vmatprep.subr.mxu0 0.0
      %1281 = vmatpush1.msra.mxu0 0.0
      %1282 = vmatprep.subr.mxu0 0.0
      %1283 = vmatpush1.msra.mxu0 0.0
      %1284 = vmatprep.subr.mxu0 0.0
      %1285 = vmatpush1.msra.mxu0 0.0
      %1286 = vmatprep.subr.mxu0 0.0
      %1287 = vmatpush1.msra.mxu0 0.0
      %1288 = vmatprep.subr.mxu0 0.0
      %1289 = vmatpush1.msra.mxu0 %v1258
      %1290 = vmatprep.subr.mxu0 0.0
      %1291 = vmatpush1.msra.mxu0 %v1158
      %1292 = vmatprep.subr.mxu0 0.0
      %1293 = vmatpush2.msra.mxu0 0.0
      %1294 = vmatprep.subr.mxu0 0.0
      %1295 = vmatpush2.msra.mxu0 0.0
      %1296 = vmatprep.subr.mxu0 0.0
      %1297 = vmatpush2.msra.mxu0 0.0
      %1298 = vmatprep.subr.mxu0 0.0
      %1299 = vmatpush2.msra.mxu0 0.0
      %1300 = vmatprep.subr.mxu0 0.0
      %1301 = vmatpush2.msra.mxu0 0.0
      %1302 = vmatprep.subr.mxu0 0.0
      %1303 = vmatpush2.msra.mxu0 0.0
      %1304 = vmatprep.subr.mxu0 0.0
      %1305 = vmatpush2.msra.mxu0 0.0
      %1306 = vmatprep.subr.mxu0 0.0
      %1307 = vmatpush2.msra.mxu0 0.0
      %1308 = vmatprep.subr.mxu0 0.0
      %1309 = vmatpush2.msra.mxu0 0.0
      %1310 = vmatprep.subr.mxu0 0.0
      %1311 = vmatpush2.msra.mxu0 0.0
      %1312 = vmatprep.subr.mxu0 0.0
      %1313 = vmatpush2.msra.mxu0 0.0
      %1314 = vmatprep.subr.mxu0 0.0
      %1315 = vmatpush2.msra.mxu0 0.0
      %1316 = vmatprep.subr.mxu0 0.0
      %1317 = vmatpush2.msra.mxu0 0.0
      %1318 = vmatprep.subr.mxu0 0.0
      %1319 = vmatpush2.msra.mxu0 0.0
      %1320 = vmatprep.subr.mxu0 0.0
      %1321 = vmatpush2.msra.mxu0 0.0
      %1322 = vmatprep.subr.mxu0 0.0
      %1323 = vmatpush2.msra.mxu0 0.0
      %1324 = vmatprep.mubr.f32.mxu0 0.0
      %1325 = vmatmul.mubr.f32.gmra.mxu0 %v1255
      %v1326 = vpop.f32.mrf.mxu0
      %v1327 = vadd.f32 0.0, %v1326
      %v1328 = vpop.f32.mrf.mxu0
      %1329 = vdwg.mxu0
      %v1330 = vrcp.pop %v1253
      %v1331 = vmul.f32 %v1327, %v1330
      %s1332 = scalar_lea.vmem %s4, 16
      %v1333 = vld [vmem:[%s1332] sm:$0xff]
      %s1334 = scalar_lea.vmem %s5, 2
      %v1335 = vld [vmem:[%s1334] sm:$0x1]
      %v1337 = vlaneseq
      %v1338 = vshrl.u32 %v1337, 7
      %v1339 = vsub.s32 0, %v1338
      %v1340 = vrot.slane %v1335, %v1339
      %v1343 = vsel %vm471, %v1333, 0
      %1345 = vmatprep.subr.mxu0 0.0
      %1346 = vmatpush1.xpose.msra.mxu0 0.0
      %1347 = vmatprep.subr.mxu0 0.0
      %1348 = vmatpush1.xpose.msra.mxu0 0.0
      %1349 = vmatprep.subr.mxu0 0.0
      %1350 = vmatpush1.xpose.msra.mxu0 0.0
      %1351 = vmatprep.subr.mxu0 0.0
      %1352 = vmatpush1.xpose.msra.mxu0 0.0
      %1353 = vmatprep.subr.mxu0 0.0
      %1354 = vmatpush1.xpose.msra.mxu0 0.0
      %1355 = vmatprep.subr.mxu0 0.0
      %1356 = vmatpush1.xpose.msra.mxu0 0.0
      %1357 = vmatprep.subr.mxu0 0.0
      %1358 = vmatpush1.xpose.msra.mxu0 0.0
      %1359 = vmatprep.subr.mxu0 0.0
      %1360 = vmatpush1.xpose.msra.mxu0 0.0
      %1361 = vmatprep.subr.mxu0 0.0
      %1362 = vmatpush1.xpose.msra.mxu0 0.0
      %1363 = vmatprep.subr.mxu0 0.0
      %1364 = vmatpush1.xpose.msra.mxu0 0.0
      %1365 = vmatprep.subr.mxu0 0.0
      %1366 = vmatpush1.xpose.msra.mxu0 0.0
      %1367 = vmatprep.subr.mxu0 0.0
      %1368 = vmatpush1.xpose.msra.mxu0 0.0
      %1369 = vmatprep.subr.mxu0 0.0
      %1370 = vmatpush1.xpose.msra.mxu0 0.0
      %1371 = vmatprep.subr.mxu0 0.0
      %1372 = vmatpush1.xpose.msra.mxu0 0.0
      %1373 = vmatprep.subr.mxu0 0.0
      %1374 = vmatpush1.xpose.msra.mxu0 0.0
      %1375 = vmatprep.subr.mxu0 0.0
      %1376 = vmatpush1.xpose.msra.mxu0 %v1343
      %1377 = vmatprep.subr.mxu0 0.0
      %1378 = vmatpush2.xpose.msra.mxu0 0.0
      %1379 = vmatprep.subr.mxu0 0.0
      %1380 = vmatpush2.xpose.msra.mxu0 0.0
      %1381 = vmatprep.subr.mxu0 0.0
      %1382 = vmatpush2.xpose.msra.mxu0 0.0
      %1383 = vmatprep.subr.mxu0 0.0
      %1384 = vmatpush2.xpose.msra.mxu0 0.0
      %1385 = vmatprep.subr.mxu0 0.0
      %1386 = vmatpush2.xpose.msra.mxu0 0.0
      %1387 = vmatprep.subr.mxu0 0.0
      %1388 = vmatpush2.xpose.msra.mxu0 0.0
      %1389 = vmatprep.subr.mxu0 0.0
      %1390 = vmatpush2.xpose.msra.mxu0 0.0
      %1391 = vmatprep.subr.mxu0 0.0
      %1392 = vmatpush2.xpose.msra.mxu0 0.0
      %1393 = vmatprep.subr.mxu0 0.0
      %1394 = vmatpush2.xpose.msra.mxu0 0.0
      %1395 = vmatprep.subr.mxu0 0.0
      %1396 = vmatpush2.xpose.msra.mxu0 0.0
      %1397 = vmatprep.subr.mxu0 0.0
      %1398 = vmatpush2.xpose.msra.mxu0 0.0
      %1399 = vmatprep.subr.mxu0 0.0
      %1400 = vmatpush2.xpose.msra.mxu0 0.0
      %1401 = vmatprep.subr.mxu0 0.0
      %1402 = vmatpush2.xpose.msra.mxu0 0.0
      %1403 = vmatprep.subr.mxu0 0.0
      %1404 = vmatpush2.xpose.msra.mxu0 0.0
      %1405 = vmatprep.subr.mxu0 0.0
      %1406 = vmatpush2.xpose.msra.mxu0 0.0
      %1407 = vmatprep.subr.mxu0 0.0
      %1408 = vmatpush2.xpose.msra.mxu0 0.0
      %1409 = vmatprep.mubr.f32.mxu0 0.0
      %1410 = vmatmul.mubr.f32.gmra.mxu0 %v473
      %v1411 = vpop.f32.mrf.mxu0
      %v1412 = vadd.f32 %v1340, %v1411
      %v1413 = vpop.f32.mrf.mxu0
      %1414 = vdwg.mxu0
      %v1415 = vmul.f32 %v1412, 0.35355338
      %s1416 = scalar_lea.vmem %s4, 48
      %v1417 = vld [vmem:[%s1416] sm:$0xff]
      %s1418 = scalar_lea.vmem %s5, 6
      %v1419 = vld [vmem:[%s1418] sm:$0x1]
      %v1421 = vlaneseq
      %v1422 = vshrl.u32 %v1421, 7
      %v1423 = vsub.s32 0, %v1422
      %v1424 = vrot.slane %v1419, %v1423
      %v1427 = vsel %vm471, %v1417, 0
      %1429 = vmatprep.subr.mxu0 0.0
      %1430 = vmatpush1.xpose.msra.mxu0 0.0
      %1431 = vmatprep.subr.mxu0 0.0
      %1432 = vmatpush1.xpose.msra.mxu0 0.0
      %1433 = vmatprep.subr.mxu0 0.0
      %1434 = vmatpush1.xpose.msra.mxu0 0.0
      %1435 = vmatprep.subr.mxu0 0.0
      %1436 = vmatpush1.xpose.msra.mxu0 0.0
      %1437 = vmatprep.subr.mxu0 0.0
      %1438 = vmatpush1.xpose.msra.mxu0 0.0
      %1439 = vmatprep.subr.mxu0 0.0
      %1440 = vmatpush1.xpose.msra.mxu0 0.0
      %1441 = vmatprep.subr.mxu0 0.0
      %1442 = vmatpush1.xpose.msra.mxu0 0.0
      %1443 = vmatprep.subr.mxu0 0.0
      %1444 = vmatpush1.xpose.msra.mxu0 0.0
      %1445 = vmatprep.subr.mxu0 0.0
      %1446 = vmatpush1.xpose.msra.mxu0 0.0
      %1447 = vmatprep.subr.mxu0 0.0
      %1448 = vmatpush1.xpose.msra.mxu0 0.0
      %1449 = vmatprep.subr.mxu0 0.0
      %1450 = vmatpush1.xpose.msra.mxu0 0.0
      %1451 = vmatprep.subr.mxu0 0.0
      %1452 = vmatpush1.xpose.msra.mxu0 0.0
      %1453 = vmatprep.subr.mxu0 0.0
      %1454 = vmatpush1.xpose.msra.mxu0 0.0
      %1455 = vmatprep.subr.mxu0 0.0
      %1456 = vmatpush1.xpose.msra.mxu0 0.0
      %1457 = vmatprep.subr.mxu0 0.0
      %1458 = vmatpush1.xpose.msra.mxu0 0.0
      %1459 = vmatprep.subr.mxu0 0.0
      %1460 = vmatpush1.xpose.msra.mxu0 %v1427
      %1461 = vmatprep.subr.mxu0 0.0
      %1462 = vmatpush2.xpose.msra.mxu0 0.0
      %1463 = vmatprep.subr.mxu0 0.0
      %1464 = vmatpush2.xpose.msra.mxu0 0.0
      %1465 = vmatprep.subr.mxu0 0.0
      %1466 = vmatpush2.xpose.msra.mxu0 0.0
      %1467 = vmatprep.subr.mxu0 0.0
      %1468 = vmatpush2.xpose.msra.mxu0 0.0
      %1469 = vmatprep.subr.mxu0 0.0
      %1470 = vmatpush2.xpose.msra.mxu0 0.0
      %1471 = vmatprep.subr.mxu0 0.0
      %1472 = vmatpush2.xpose.msra.mxu0 0.0
      %1473 = vmatprep.subr.mxu0 0.0
      %1474 = vmatpush2.xpose.msra.mxu0 0.0
      %1475 = vmatprep.subr.mxu0 0.0
      %1476 = vmatpush2.xpose.msra.mxu0 0.0
      %1477 = vmatprep.subr.mxu0 0.0
      %1478 = vmatpush2.xpose.msra.mxu0 0.0
      %1479 = vmatprep.subr.mxu0 0.0
      %1480 = vmatpush2.xpose.msra.mxu0 0.0
      %1481 = vmatprep.subr.mxu0 0.0
      %1482 = vmatpush2.xpose.msra.mxu0 0.0
      %1483 = vmatprep.subr.mxu0 0.0
      %1484 = vmatpush2.xpose.msra.mxu0 0.0
      %1485 = vmatprep.subr.mxu0 0.0
      %1486 = vmatpush2.xpose.msra.mxu0 0.0
      %1487 = vmatprep.subr.mxu0 0.0
      %1488 = vmatpush2.xpose.msra.mxu0 0.0
      %1489 = vmatprep.subr.mxu0 0.0
      %1490 = vmatpush2.xpose.msra.mxu0 0.0
      %1491 = vmatprep.subr.mxu0 0.0
      %1492 = vmatpush2.xpose.msra.mxu0 0.0
      %1493 = vmatprep.mubr.f32.mxu0 0.0
      %1494 = vmatmul.mubr.f32.gmra.mxu0 %v560
      %v1495 = vpop.f32.mrf.mxu0
      %v1496 = vadd.f32 %v1424, %v1495
      %v1497 = vpop.f32.mrf.mxu0
      %1498 = vmatprep.mubr.f32.mxu0 0.0
      %1499 = vmatmul.mubr.f32.gmra.mxu0 %v563
      %v1500 = vpop.f32.mrf.mxu0
      %v1501 = vadd.f32 %v1424, %v1500
      %v1502 = vpop.f32.mrf.mxu0
      %1503 = vdwg.mxu0
      %s1504 = scalar_lea.vmem %s4, 80
      %v1505 = vld [vmem:[%s1504] sm:$0xff]
      %s1506 = scalar_lea.vmem %s5, 10
      %v1507 = vld [vmem:[%s1506] sm:$0x1]
      %v1509 = vlaneseq
      %v1510 = vshrl.u32 %v1509, 7
      %v1511 = vsub.s32 0, %v1510
      %v1512 = vrot.slane %v1507, %v1511
      %v1515 = vsel %vm471, %v1505, 0
      %1517 = vmatprep.subr.mxu0 0.0
      %1518 = vmatpush1.xpose.msra.mxu0 0.0
      %1519 = vmatprep.subr.mxu0 0.0
      %1520 = vmatpush1.xpose.msra.mxu0 0.0
      %1521 = vmatprep.subr.mxu0 0.0
      %1522 = vmatpush1.xpose.msra.mxu0 0.0
      %1523 = vmatprep.subr.mxu0 0.0
      %1524 = vmatpush1.xpose.msra.mxu0 0.0
      %1525 = vmatprep.subr.mxu0 0.0
      %1526 = vmatpush1.xpose.msra.mxu0 0.0
      %1527 = vmatprep.subr.mxu0 0.0
      %1528 = vmatpush1.xpose.msra.mxu0 0.0
      %1529 = vmatprep.subr.mxu0 0.0
      %1530 = vmatpush1.xpose.msra.mxu0 0.0
      %1531 = vmatprep.subr.mxu0 0.0
      %1532 = vmatpush1.xpose.msra.mxu0 0.0
      %1533 = vmatprep.subr.mxu0 0.0
      %1534 = vmatpush1.xpose.msra.mxu0 0.0
      %1535 = vmatprep.subr.mxu0 0.0
      %1536 = vmatpush1.xpose.msra.mxu0 0.0
      %1537 = vmatprep.subr.mxu0 0.0
      %1538 = vmatpush1.xpose.msra.mxu0 0.0
      %1539 = vmatprep.subr.mxu0 0.0
      %1540 = vmatpush1.xpose.msra.mxu0 0.0
      %1541 = vmatprep.subr.mxu0 0.0
      %1542 = vmatpush1.xpose.msra.mxu0 0.0
      %1543 = vmatprep.subr.mxu0 0.0
      %1544 = vmatpush1.xpose.msra.mxu0 0.0
      %1545 = vmatprep.subr.mxu0 0.0
      %1546 = vmatpush1.xpose.msra.mxu0 0.0
      %1547 = vmatprep.subr.mxu0 0.0
      %1548 = vmatpush1.xpose.msra.mxu0 %v1515
      %1549 = vmatprep.subr.mxu0 0.0
      %1550 = vmatpush2.xpose.msra.mxu0 0.0
      %1551 = vmatprep.subr.mxu0 0.0
      %1552 = vmatpush2.xpose.msra.mxu0 0.0
      %1553 = vmatprep.subr.mxu0 0.0
      %1554 = vmatpush2.xpose.msra.mxu0 0.0
      %1555 = vmatprep.subr.mxu0 0.0
      %1556 = vmatpush2.xpose.msra.mxu0 0.0
      %1557 = vmatprep.subr.mxu0 0.0
      %1558 = vmatpush2.xpose.msra.mxu0 0.0
      %1559 = vmatprep.subr.mxu0 0.0
      %1560 = vmatpush2.xpose.msra.mxu0 0.0
      %1561 = vmatprep.subr.mxu0 0.0
      %1562 = vmatpush2.xpose.msra.mxu0 0.0
      %1563 = vmatprep.subr.mxu0 0.0
      %1564 = vmatpush2.xpose.msra.mxu0 0.0
      %1565 = vmatprep.subr.mxu0 0.0
      %1566 = vmatpush2.xpose.msra.mxu0 0.0
      %1567 = vmatprep.subr.mxu0 0.0
      %1568 = vmatpush2.xpose.msra.mxu0 0.0
      %1569 = vmatprep.subr.mxu0 0.0
      %1570 = vmatpush2.xpose.msra.mxu0 0.0
      %1571 = vmatprep.subr.mxu0 0.0
      %1572 = vmatpush2.xpose.msra.mxu0 0.0
      %1573 = vmatprep.subr.mxu0 0.0
      %1574 = vmatpush2.xpose.msra.mxu0 0.0
      %1575 = vmatprep.subr.mxu0 0.0
      %1576 = vmatpush2.xpose.msra.mxu0 0.0
      %1577 = vmatprep.subr.mxu0 0.0
      %1578 = vmatpush2.xpose.msra.mxu0 0.0
      %1579 = vmatprep.subr.mxu0 0.0
      %1580 = vmatpush2.xpose.msra.mxu0 0.0
      %1581 = vmatprep.mubr.f32.mxu0 0.0
      %1582 = vmatmul.mubr.f32.gmra.mxu0 %v654
      %v1583 = vpop.f32.mrf.mxu0
      %v1584 = vadd.f32 %v1512, %v1583
      %v1585 = vpop.f32.mrf.mxu0
      %1586 = vmatprep.mubr.f32.mxu0 0.0
      %1587 = vmatmul.mubr.f32.gmra.mxu0 %v657
      %v1588 = vpop.f32.mrf.mxu0
      %v1589 = vadd.f32 %v1512, %v1588
      %v1590 = vpop.f32.mrf.mxu0
      %1591 = vdwg.mxu0
      %v1593 = vsel %vm737, %v1415, 0
      %v1596 = vsel %vm737, %v1496, 0
      %v1599 = vsel %vm737, %v1501, 0
      %1601 = vmatprep.subr.mxu0 0.0
      %1602 = vmatpush1.xpose.msra.mxu0 0.0
      %1603 = vmatprep.subr.mxu0 0.0
      %1604 = vmatpush1.xpose.msra.mxu0 0.0
      %1605 = vmatprep.subr.mxu0 0.0
      %1606 = vmatpush1.xpose.msra.mxu0 0.0
      %1607 = vmatprep.subr.mxu0 0.0
      %1608 = vmatpush1.xpose.msra.mxu0 0.0
      %1609 = vmatprep.subr.mxu0 0.0
      %1610 = vmatpush1.xpose.msra.mxu0 0.0
      %1611 = vmatprep.subr.mxu0 0.0
      %1612 = vmatpush1.xpose.msra.mxu0 0.0
      %1613 = vmatprep.subr.mxu0 0.0
      %1614 = vmatpush1.xpose.msra.mxu0 0.0
      %1615 = vmatprep.subr.mxu0 0.0
      %1616 = vmatpush1.xpose.msra.mxu0 0.0
      %1617 = vmatprep.subr.mxu0 0.0
      %1618 = vmatpush1.xpose.msra.mxu0 0.0
      %1619 = vmatprep.subr.mxu0 0.0
      %1620 = vmatpush1.xpose.msra.mxu0 0.0
      %1621 = vmatprep.subr.mxu0 0.0
      %1622 = vmatpush1.xpose.msra.mxu0 0.0
      %1623 = vmatprep.subr.mxu0 0.0
      %1624 = vmatpush1.xpose.msra.mxu0 0.0
      %1625 = vmatprep.subr.mxu0 0.0
      %1626 = vmatpush1.xpose.msra.mxu0 0.0
      %1627 = vmatprep.subr.mxu0 0.0
      %1628 = vmatpush1.xpose.msra.mxu0 0.0
      %1629 = vmatprep.subr.mxu0 0.0
      %1630 = vmatpush1.xpose.msra.mxu0 %v1599
      %1631 = vmatprep.subr.mxu0 0.0
      %1632 = vmatpush1.xpose.msra.mxu0 %v1596
      %1633 = vmatprep.subr.mxu0 0.0
      %1634 = vmatpush2.xpose.msra.mxu0 0.0
      %1635 = vmatprep.subr.mxu0 0.0
      %1636 = vmatpush2.xpose.msra.mxu0 0.0
      %1637 = vmatprep.subr.mxu0 0.0
      %1638 = vmatpush2.xpose.msra.mxu0 0.0
      %1639 = vmatprep.subr.mxu0 0.0
      %1640 = vmatpush2.xpose.msra.mxu0 0.0
      %1641 = vmatprep.subr.mxu0 0.0
      %1642 = vmatpush2.xpose.msra.mxu0 0.0
      %1643 = vmatprep.subr.mxu0 0.0
      %1644 = vmatpush2.xpose.msra.mxu0 0.0
      %1645 = vmatprep.subr.mxu0 0.0
      %1646 = vmatpush2.xpose.msra.mxu0 0.0
      %1647 = vmatprep.subr.mxu0 0.0
      %1648 = vmatpush2.xpose.msra.mxu0 0.0
      %1649 = vmatprep.subr.mxu0 0.0
      %1650 = vmatpush2.xpose.msra.mxu0 0.0
      %1651 = vmatprep.subr.mxu0 0.0
      %1652 = vmatpush2.xpose.msra.mxu0 0.0
      %1653 = vmatprep.subr.mxu0 0.0
      %1654 = vmatpush2.xpose.msra.mxu0 0.0
      %1655 = vmatprep.subr.mxu0 0.0
      %1656 = vmatpush2.xpose.msra.mxu0 0.0
      %1657 = vmatprep.subr.mxu0 0.0
      %1658 = vmatpush2.xpose.msra.mxu0 0.0
      %1659 = vmatprep.subr.mxu0 0.0
      %1660 = vmatpush2.xpose.msra.mxu0 0.0
      %1661 = vmatprep.subr.mxu0 0.0
      %1662 = vmatpush2.xpose.msra.mxu0 0.0
      %1663 = vmatprep.subr.mxu0 0.0
      %1664 = vmatpush2.xpose.msra.mxu0 0.0
      %1665 = vmatprep.mubr.f32.mxu0 0.0
      %1666 = vmatmul.mubr.f32.gmra.mxu0 %v1593
      %v1667 = vpop.f32.mrf.mxu0
      %v1668 = vadd.f32 0.0, %v1667
      %v1669 = vpop.f32.mrf.mxu0
      %1670 = vdwg.mxu0
      %v1671 = vsel %vm817, %v1668, -inf
      %1672 = vmax.xlane.f32.xlu0 %v1671
      %v1673 = vpop.xlane.xlu0 %1672
      %v1674 = vsub.f32 %v1668, %v1673
      %v1675 = vmul.f32 %v1674, 1.442695
      %v1676 = vpow.pop %v1675
      %v1677 = vsel %vm817, %v1676, 0.0
      %1678 = vadd.xlane.f32.xlu0 %v1677
      %v1679 = vpop.xlane.xlu0 %1678
      %v1681 = vsel %vm817, %v1676, 0
      %v1684 = vsel %vm830, %v1589, 0
      %1686 = vmatprep.subr.mxu0 0.0
      %1687 = vmatpush1.msra.mxu0 0.0
      %1688 = vmatprep.subr.mxu0 0.0
      %1689 = vmatpush1.msra.mxu0 0.0
      %1690 = vmatprep.subr.mxu0 0.0
      %1691 = vmatpush1.msra.mxu0 0.0
      %1692 = vmatprep.subr.mxu0 0.0
      %1693 = vmatpush1.msra.mxu0 0.0
      %1694 = vmatprep.subr.mxu0 0.0
      %1695 = vmatpush1.msra.mxu0 0.0
      %1696 = vmatprep.subr.mxu0 0.0
      %1697 = vmatpush1.msra.mxu0 0.0
      %1698 = vmatprep.subr.mxu0 0.0
      %1699 = vmatpush1.msra.mxu0 0.0
      %1700 = vmatprep.subr.mxu0 0.0
      %1701 = vmatpush1.msra.mxu0 0.0
      %1702 = vmatprep.subr.mxu0 0.0
      %1703 = vmatpush1.msra.mxu0 0.0
      %1704 = vmatprep.subr.mxu0 0.0
      %1705 = vmatpush1.msra.mxu0 0.0
      %1706 = vmatprep.subr.mxu0 0.0
      %1707 = vmatpush1.msra.mxu0 0.0
      %1708 = vmatprep.subr.mxu0 0.0
      %1709 = vmatpush1.msra.mxu0 0.0
      %1710 = vmatprep.subr.mxu0 0.0
      %1711 = vmatpush1.msra.mxu0 0.0
      %1712 = vmatprep.subr.mxu0 0.0
      %1713 = vmatpush1.msra.mxu0 0.0
      %1714 = vmatprep.subr.mxu0 0.0
      %1715 = vmatpush1.msra.mxu0 %v1684
      %1716 = vmatprep.subr.mxu0 0.0
      %1717 = vmatpush1.msra.mxu0 %v1584
      %1718 = vmatprep.subr.mxu0 0.0
      %1719 = vmatpush2.msra.mxu0 0.0
      %1720 = vmatprep.subr.mxu0 0.0
      %1721 = vmatpush2.msra.mxu0 0.0
      %1722 = vmatprep.subr.mxu0 0.0
      %1723 = vmatpush2.msra.mxu0 0.0
      %1724 = vmatprep.subr.mxu0 0.0
      %1725 = vmatpush2.msra.mxu0 0.0
      %1726 = vmatprep.subr.mxu0 0.0
      %1727 = vmatpush2.msra.mxu0 0.0
      %1728 = vmatprep.subr.mxu0 0.0
      %1729 = vmatpush2.msra.mxu0 0.0
      %1730 = vmatprep.subr.mxu0 0.0
      %1731 = vmatpush2.msra.mxu0 0.0
      %1732 = vmatprep.subr.mxu0 0.0
      %1733 = vmatpush2.msra.mxu0 0.0
      %1734 = vmatprep.subr.mxu0 0.0
      %1735 = vmatpush2.msra.mxu0 0.0
      %1736 = vmatprep.subr.mxu0 0.0
      %1737 = vmatpush2.msra.mxu0 0.0
      %1738 = vmatprep.subr.mxu0 0.0
      %1739 = vmatpush2.msra.mxu0 0.0
      %1740 = vmatprep.subr.mxu0 0.0
      %1741 = vmatpush2.msra.mxu0 0.0
      %1742 = vmatprep.subr.mxu0 0.0
      %1743 = vmatpush2.msra.mxu0 0.0
      %1744 = vmatprep.subr.mxu0 0.0
      %1745 = vmatpush2.msra.mxu0 0.0
      %1746 = vmatprep.subr.mxu0 0.0
      %1747 = vmatpush2.msra.mxu0 0.0
      %1748 = vmatprep.subr.mxu0 0.0
      %1749 = vmatpush2.msra.mxu0 0.0
      %1750 = vmatprep.mubr.f32.mxu0 0.0
      %1751 = vmatmul.mubr.f32.gmra.mxu0 %v1681
      %v1752 = vpop.f32.mrf.mxu0
      %v1753 = vadd.f32 0.0, %v1752
      %v1754 = vpop.f32.mrf.mxu0
      %1755 = vdwg.mxu0
      %v1756 = vrcp.pop %v1679
      %v1757 = vmul.f32 %v1753, %v1756
      %s1758 = scalar_lea.vmem %s4, 24
      %v1759 = vld [vmem:[%s1758] sm:$0xff]
      %s1760 = scalar_lea.vmem %s5, 3
      %v1761 = vld [vmem:[%s1760] sm:$0x1]
      %v1763 = vlaneseq
      %v1764 = vshrl.u32 %v1763, 7
      %v1765 = vsub.s32 0, %v1764
      %v1766 = vrot.slane %v1761, %v1765
      %v1769 = vsel %vm471, %v1759, 0
      %1771 = vmatprep.subr.mxu0 0.0
      %1772 = vmatpush1.xpose.msra.mxu0 0.0
      %1773 = vmatprep.subr.mxu0 0.0
      %1774 = vmatpush1.xpose.msra.mxu0 0.0
      %1775 = vmatprep.subr.mxu0 0.0
      %1776 = vmatpush1.xpose.msra.mxu0 0.0
      %1777 = vmatprep.subr.mxu0 0.0
      %1778 = vmatpush1.xpose.msra.mxu0 0.0
      %1779 = vmatprep.subr.mxu0 0.0
      %1780 = vmatpush1.xpose.msra.mxu0 0.0
      %1781 = vmatprep.subr.mxu0 0.0
      %1782 = vmatpush1.xpose.msra.mxu0 0.0
      %1783 = vmatprep.subr.mxu0 0.0
      %1784 = vmatpush1.xpose.msra.mxu0 0.0
      %1785 = vmatprep.subr.mxu0 0.0
      %1786 = vmatpush1.xpose.msra.mxu0 0.0
      %1787 = vmatprep.subr.mxu0 0.0
      %1788 = vmatpush1.xpose.msra.mxu0 0.0
      %1789 = vmatprep.subr.mxu0 0.0
      %1790 = vmatpush1.xpose.msra.mxu0 0.0
      %1791 = vmatprep.subr.mxu0 0.0
      %1792 = vmatpush1.xpose.msra.mxu0 0.0
      %1793 = vmatprep.subr.mxu0 0.0
      %1794 = vmatpush1.xpose.msra.mxu0 0.0
      %1795 = vmatprep.subr.mxu0 0.0
      %1796 = vmatpush1.xpose.msra.mxu0 0.0
      %1797 = vmatprep.subr.mxu0 0.0
      %1798 = vmatpush1.xpose.msra.mxu0 0.0
      %1799 = vmatprep.subr.mxu0 0.0
      %1800 = vmatpush1.xpose.msra.mxu0 0.0
      %1801 = vmatprep.subr.mxu0 0.0
      %1802 = vmatpush1.xpose.msra.mxu0 %v1769
      %1803 = vmatprep.subr.mxu0 0.0
      %1804 = vmatpush2.xpose.msra.mxu0 0.0
      %1805 = vmatprep.subr.mxu0 0.0
      %1806 = vmatpush2.xpose.msra.mxu0 0.0
      %1807 = vmatprep.subr.mxu0 0.0
      %1808 = vmatpush2.xpose.msra.mxu0 0.0
      %1809 = vmatprep.subr.mxu0 0.0
      %1810 = vmatpush2.xpose.msra.mxu0 0.0
      %1811 = vmatprep.subr.mxu0 0.0
      %1812 = vmatpush2.xpose.msra.mxu0 0.0
      %1813 = vmatprep.subr.mxu0 0.0
      %1814 = vmatpush2.xpose.msra.mxu0 0.0
      %1815 = vmatprep.subr.mxu0 0.0
      %1816 = vmatpush2.xpose.msra.mxu0 0.0
      %1817 = vmatprep.subr.mxu0 0.0
      %1818 = vmatpush2.xpose.msra.mxu0 0.0
      %1819 = vmatprep.subr.mxu0 0.0
      %1820 = vmatpush2.xpose.msra.mxu0 0.0
      %1821 = vmatprep.subr.mxu0 0.0
      %1822 = vmatpush2.xpose.msra.mxu0 0.0
      %1823 = vmatprep.subr.mxu0 0.0
      %1824 = vmatpush2.xpose.msra.mxu0 0.0
      %1825 = vmatprep.subr.mxu0 0.0
      %1826 = vmatpush2.xpose.msra.mxu0 0.0
      %1827 = vmatprep.subr.mxu0 0.0
      %1828 = vmatpush2.xpose.msra.mxu0 0.0
      %1829 = vmatprep.subr.mxu0 0.0
      %1830 = vmatpush2.xpose.msra.mxu0 0.0
      %1831 = vmatprep.subr.mxu0 0.0
      %1832 = vmatpush2.xpose.msra.mxu0 0.0
      %1833 = vmatprep.subr.mxu0 0.0
      %1834 = vmatpush2.xpose.msra.mxu0 0.0
      %1835 = vmatprep.mubr.f32.mxu0 0.0
      %1836 = vmatmul.mubr.f32.gmra.mxu0 %v473
      %v1837 = vpop.f32.mrf.mxu0
      %v1838 = vadd.f32 %v1766, %v1837
      %v1839 = vpop.f32.mrf.mxu0
      %1840 = vdwg.mxu0
      %v1841 = vmul.f32 %v1838, 0.35355338
      %s1842 = scalar_lea.vmem %s4, 56
      %v1843 = vld [vmem:[%s1842] sm:$0xff]
      %s1844 = scalar_lea.vmem %s5, 7
      %v1845 = vld [vmem:[%s1844] sm:$0x1]
      %v1847 = vlaneseq
      %v1848 = vshrl.u32 %v1847, 7
      %v1849 = vsub.s32 0, %v1848
      %v1850 = vrot.slane %v1845, %v1849
      %v1853 = vsel %vm471, %v1843, 0
      %1855 = vmatprep.subr.mxu0 0.0
      %1856 = vmatpush1.xpose.msra.mxu0 0.0
      %1857 = vmatprep.subr.mxu0 0.0
      %1858 = vmatpush1.xpose.msra.mxu0 0.0
      %1859 = vmatprep.subr.mxu0 0.0
      %1860 = vmatpush1.xpose.msra.mxu0 0.0
      %1861 = vmatprep.subr.mxu0 0.0
      %1862 = vmatpush1.xpose.msra.mxu0 0.0
      %1863 = vmatprep.subr.mxu0 0.0
      %1864 = vmatpush1.xpose.msra.mxu0 0.0
      %1865 = vmatprep.subr.mxu0 0.0
      %1866 = vmatpush1.xpose.msra.mxu0 0.0
      %1867 = vmatprep.subr.mxu0 0.0
      %1868 = vmatpush1.xpose.msra.mxu0 0.0
      %1869 = vmatprep.subr.mxu0 0.0
      %1870 = vmatpush1.xpose.msra.mxu0 0.0
      %1871 = vmatprep.subr.mxu0 0.0
      %1872 = vmatpush1.xpose.msra.mxu0 0.0
      %1873 = vmatprep.subr.mxu0 0.0
      %1874 = vmatpush1.xpose.msra.mxu0 0.0
      %1875 = vmatprep.subr.mxu0 0.0
      %1876 = vmatpush1.xpose.msra.mxu0 0.0
      %1877 = vmatprep.subr.mxu0 0.0
      %1878 = vmatpush1.xpose.msra.mxu0 0.0
      %1879 = vmatprep.subr.mxu0 0.0
      %1880 = vmatpush1.xpose.msra.mxu0 0.0
      %1881 = vmatprep.subr.mxu0 0.0
      %1882 = vmatpush1.xpose.msra.mxu0 0.0
      %1883 = vmatprep.subr.mxu0 0.0
      %1884 = vmatpush1.xpose.msra.mxu0 0.0
      %1885 = vmatprep.subr.mxu0 0.0
      %1886 = vmatpush1.xpose.msra.mxu0 %v1853
      %1887 = vmatprep.subr.mxu0 0.0
      %1888 = vmatpush2.xpose.msra.mxu0 0.0
      %1889 = vmatprep.subr.mxu0 0.0
      %1890 = vmatpush2.xpose.msra.mxu0 0.0
      %1891 = vmatprep.subr.mxu0 0.0
      %1892 = vmatpush2.xpose.msra.mxu0 0.0
      %1893 = vmatprep.subr.mxu0 0.0
      %1894 = vmatpush2.xpose.msra.mxu0 0.0
      %1895 = vmatprep.subr.mxu0 0.0
      %1896 = vmatpush2.xpose.msra.mxu0 0.0
      %1897 = vmatprep.subr.mxu0 0.0
      %1898 = vmatpush2.xpose.msra.mxu0 0.0
      %1899 = vmatprep.subr.mxu0 0.0
      %1900 = vmatpush2.xpose.msra.mxu0 0.0
      %1901 = vmatprep.subr.mxu0 0.0
      %1902 = vmatpush2.xpose.msra.mxu0 0.0
      %1903 = vmatprep.subr.mxu0 0.0
      %1904 = vmatpush2.xpose.msra.mxu0 0.0
      %1905 = vmatprep.subr.mxu0 0.0
      %1906 = vmatpush2.xpose.msra.mxu0 0.0
      %1907 = vmatprep.subr.mxu0 0.0
      %1908 = vmatpush2.xpose.msra.mxu0 0.0
      %1909 = vmatprep.subr.mxu0 0.0
      %1910 = vmatpush2.xpose.msra.mxu0 0.0
      %1911 = vmatprep.subr.mxu0 0.0
      %1912 = vmatpush2.xpose.msra.mxu0 0.0
      %1913 = vmatprep.subr.mxu0 0.0
      %1914 = vmatpush2.xpose.msra.mxu0 0.0
      %1915 = vmatprep.subr.mxu0 0.0
      %1916 = vmatpush2.xpose.msra.mxu0 0.0
      %1917 = vmatprep.subr.mxu0 0.0
      %1918 = vmatpush2.xpose.msra.mxu0 0.0
      %1919 = vmatprep.mubr.f32.mxu0 0.0
      %1920 = vmatmul.mubr.f32.gmra.mxu0 %v560
      %v1921 = vpop.f32.mrf.mxu0
      %v1922 = vadd.f32 %v1850, %v1921
      %v1923 = vpop.f32.mrf.mxu0
      %1924 = vmatprep.mubr.f32.mxu0 0.0
      %1925 = vmatmul.mubr.f32.gmra.mxu0 %v563
      %v1926 = vpop.f32.mrf.mxu0
      %v1927 = vadd.f32 %v1850, %v1926
      %v1928 = vpop.f32.mrf.mxu0
      %1929 = vdwg.mxu0
      %s1930 = scalar_lea.vmem %s4, 88
      %v1931 = vld [vmem:[%s1930] sm:$0xff]
      %s1932 = scalar_lea.vmem %s5, 11
      %v1933 = vld [vmem:[%s1932] sm:$0x1]
      %v1935 = vlaneseq
      %v1936 = vshrl.u32 %v1935, 7
      %v1937 = vsub.s32 0, %v1936
      %v1938 = vrot.slane %v1933, %v1937
      %v1941 = vsel %vm471, %v1931, 0
      %1943 = vmatprep.subr.mxu0 0.0
      %1944 = vmatpush1.xpose.msra.mxu0 0.0
      %1945 = vmatprep.subr.mxu0 0.0
      %1946 = vmatpush1.xpose.msra.mxu0 0.0
      %1947 = vmatprep.subr.mxu0 0.0
      %1948 = vmatpush1.xpose.msra.mxu0 0.0
      %1949 = vmatprep.subr.mxu0 0.0
      %1950 = vmatpush1.xpose.msra.mxu0 0.0
      %1951 = vmatprep.subr.mxu0 0.0
      %1952 = vmatpush1.xpose.msra.mxu0 0.0
      %1953 = vmatprep.subr.mxu0 0.0
      %1954 = vmatpush1.xpose.msra.mxu0 0.0
      %1955 = vmatprep.subr.mxu0 0.0
      %1956 = vmatpush1.xpose.msra.mxu0 0.0
      %1957 = vmatprep.subr.mxu0 0.0
      %1958 = vmatpush1.xpose.msra.mxu0 0.0
      %1959 = vmatprep.subr.mxu0 0.0
      %1960 = vmatpush1.xpose.msra.mxu0 0.0
      %1961 = vmatprep.subr.mxu0 0.0
      %1962 = vmatpush1.xpose.msra.mxu0 0.0
      %1963 = vmatprep.subr.mxu0 0.0
      %1964 = vmatpush1.xpose.msra.mxu0 0.0
      %1965 = vmatprep.subr.mxu0 0.0
      %1966 = vmatpush1.xpose.msra.mxu0 0.0
      %1967 = vmatprep.subr.mxu0 0.0
      %1968 = vmatpush1.xpose.msra.mxu0 0.0
      %1969 = vmatprep.subr.mxu0 0.0
      %1970 = vmatpush1.xpose.msra.mxu0 0.0
      %1971 = vmatprep.subr.mxu0 0.0
      %1972 = vmatpush1.xpose.msra.mxu0 0.0
      %1973 = vmatprep.subr.mxu0 0.0
      %1974 = vmatpush1.xpose.msra.mxu0 %v1941
      %1975 = vmatprep.subr.mxu0 0.0
      %1976 = vmatpush2.xpose.msra.mxu0 0.0
      %1977 = vmatprep.subr.mxu0 0.0
      %1978 = vmatpush2.xpose.msra.mxu0 0.0
      %1979 = vmatprep.subr.mxu0 0.0
      %1980 = vmatpush2.xpose.msra.mxu0 0.0
      %1981 = vmatprep.subr.mxu0 0.0
      %1982 = vmatpush2.xpose.msra.mxu0 0.0
      %1983 = vmatprep.subr.mxu0 0.0
      %1984 = vmatpush2.xpose.msra.mxu0 0.0
      %1985 = vmatprep.subr.mxu0 0.0
      %1986 = vmatpush2.xpose.msra.mxu0 0.0
      %1987 = vmatprep.subr.mxu0 0.0
      %1988 = vmatpush2.xpose.msra.mxu0 0.0
      %1989 = vmatprep.subr.mxu0 0.0
      %1990 = vmatpush2.xpose.msra.mxu0 0.0
      %1991 = vmatprep.subr.mxu0 0.0
      %1992 = vmatpush2.xpose.msra.mxu0 0.0
      %1993 = vmatprep.subr.mxu0 0.0
      %1994 = vmatpush2.xpose.msra.mxu0 0.0
      %1995 = vmatprep.subr.mxu0 0.0
      %1996 = vmatpush2.xpose.msra.mxu0 0.0
      %1997 = vmatprep.subr.mxu0 0.0
      %1998 = vmatpush2.xpose.msra.mxu0 0.0
      %1999 = vmatprep.subr.mxu0 0.0
      %2000 = vmatpush2.xpose.msra.mxu0 0.0
      %2001 = vmatprep.subr.mxu0 0.0
      %2002 = vmatpush2.xpose.msra.mxu0 0.0
      %2003 = vmatprep.subr.mxu0 0.0
      %2004 = vmatpush2.xpose.msra.mxu0 0.0
      %2005 = vmatprep.subr.mxu0 0.0
      %2006 = vmatpush2.xpose.msra.mxu0 0.0
      %2007 = vmatprep.mubr.f32.mxu0 0.0
      %2008 = vmatmul.mubr.f32.gmra.mxu0 %v654
      %v2009 = vpop.f32.mrf.mxu0
      %v2010 = vadd.f32 %v1938, %v2009
      %v2011 = vpop.f32.mrf.mxu0
      %2012 = vmatprep.mubr.f32.mxu0 0.0
      %2013 = vmatmul.mubr.f32.gmra.mxu0 %v657
      %v2014 = vpop.f32.mrf.mxu0
      %v2015 = vadd.f32 %v1938, %v2014
      %v2016 = vpop.f32.mrf.mxu0
      %2017 = vdwg.mxu0
      %v2019 = vsel %vm737, %v1841, 0
      %v2022 = vsel %vm737, %v1922, 0
      %v2025 = vsel %vm737, %v1927, 0
      %2027 = vmatprep.subr.mxu0 0.0
      %2028 = vmatpush1.xpose.msra.mxu0 0.0
      %2029 = vmatprep.subr.mxu0 0.0
      %2030 = vmatpush1.xpose.msra.mxu0 0.0
      %2031 = vmatprep.subr.mxu0 0.0
      %2032 = vmatpush1.xpose.msra.mxu0 0.0
      %2033 = vmatprep.subr.mxu0 0.0
      %2034 = vmatpush1.xpose.msra.mxu0 0.0
      %2035 = vmatprep.subr.mxu0 0.0
      %2036 = vmatpush1.xpose.msra.mxu0 0.0
      %2037 = vmatprep.subr.mxu0 0.0
      %2038 = vmatpush1.xpose.msra.mxu0 0.0
      %2039 = vmatprep.subr.mxu0 0.0
      %2040 = vmatpush1.xpose.msra.mxu0 0.0
      %2041 = vmatprep.subr.mxu0 0.0
      %2042 = vmatpush1.xpose.msra.mxu0 0.0
      %2043 = vmatprep.subr.mxu0 0.0
      %2044 = vmatpush1.xpose.msra.mxu0 0.0
      %2045 = vmatprep.subr.mxu0 0.0
      %2046 = vmatpush1.xpose.msra.mxu0 0.0
      %2047 = vmatprep.subr.mxu0 0.0
      %2048 = vmatpush1.xpose.msra.mxu0 0.0
      %2049 = vmatprep.subr.mxu0 0.0
      %2050 = vmatpush1.xpose.msra.mxu0 0.0
      %2051 = vmatprep.subr.mxu0 0.0
      %2052 = vmatpush1.xpose.msra.mxu0 0.0
      %2053 = vmatprep.subr.mxu0 0.0
      %2054 = vmatpush1.xpose.msra.mxu0 0.0
      %2055 = vmatprep.subr.mxu0 0.0
      %2056 = vmatpush1.xpose.msra.mxu0 %v2025
      %2057 = vmatprep.subr.mxu0 0.0
      %2058 = vmatpush1.xpose.msra.mxu0 %v2022
      %2059 = vmatprep.subr.mxu0 0.0
      %2060 = vmatpush2.xpose.msra.mxu0 0.0
      %2061 = vmatprep.subr.mxu0 0.0
      %2062 = vmatpush2.xpose.msra.mxu0 0.0
      %2063 = vmatprep.subr.mxu0 0.0
      %2064 = vmatpush2.xpose.msra.mxu0 0.0
      %2065 = vmatprep.subr.mxu0 0.0
      %2066 = vmatpush2.xpose.msra.mxu0 0.0
      %2067 = vmatprep.subr.mxu0 0.0
      %2068 = vmatpush2.xpose.msra.mxu0 0.0
      %2069 = vmatprep.subr.mxu0 0.0
      %2070 = vmatpush2.xpose.msra.mxu0 0.0
      %2071 = vmatprep.subr.mxu0 0.0
      %2072 = vmatpush2.xpose.msra.mxu0 0.0
      %2073 = vmatprep.subr.mxu0 0.0
      %2074 = vmatpush2.xpose.msra.mxu0 0.0
      %2075 = vmatprep.subr.mxu0 0.0
      %2076 = vmatpush2.xpose.msra.mxu0 0.0
      %2077 = vmatprep.subr.mxu0 0.0
      %2078 = vmatpush2.xpose.msra.mxu0 0.0
      %2079 = vmatprep.subr.mxu0 0.0
      %2080 = vmatpush2.xpose.msra.mxu0 0.0
      %2081 = vmatprep.subr.mxu0 0.0
      %2082 = vmatpush2.xpose.msra.mxu0 0.0
      %2083 = vmatprep.subr.mxu0 0.0
      %2084 = vmatpush2.xpose.msra.mxu0 0.0
      %2085 = vmatprep.subr.mxu0 0.0
      %2086 = vmatpush2.xpose.msra.mxu0 0.0
      %2087 = vmatprep.subr.mxu0 0.0
      %2088 = vmatpush2.xpose.msra.mxu0 0.0
      %2089 = vmatprep.subr.mxu0 0.0
      %2090 = vmatpush2.xpose.msra.mxu0 0.0
      %2091 = vmatprep.mubr.f32.mxu0 0.0
      %2092 = vmatmul.mubr.f32.gmra.mxu0 %v2019
      %v2093 = vpop.f32.mrf.mxu0
      %v2094 = vadd.f32 0.0, %v2093
      %v2095 = vpop.f32.mrf.mxu0
      %2096 = vdwg.mxu0
      %v2097 = vsel %vm817, %v2094, -inf
      %2098 = vmax.xlane.f32.xlu0 %v2097
      %v2099 = vpop.xlane.xlu0 %2098
      %v2100 = vsub.f32 %v2094, %v2099
      %v2101 = vmul.f32 %v2100, 1.442695
      %v2102 = vpow.pop %v2101
      %v2103 = vsel %vm817, %v2102, 0.0
      %2104 = vadd.xlane.f32.xlu0 %v2103
      %v2105 = vpop.xlane.xlu0 %2104
      %v2107 = vsel %vm817, %v2102, 0
      %v2110 = vsel %vm830, %v2015, 0
      %2112 = vmatprep.subr.mxu0 0.0
      %2113 = vmatpush1.msra.mxu0 0.0
      %2114 = vmatprep.subr.mxu0 0.0
      %2115 = vmatpush1.msra.mxu0 0.0
      %2116 = vmatprep.subr.mxu0 0.0
      %2117 = vmatpush1.msra.mxu0 0.0
      %2118 = vmatprep.subr.mxu0 0.0
      %2119 = vmatpush1.msra.mxu0 0.0
      %2120 = vmatprep.subr.mxu0 0.0
      %2121 = vmatpush1.msra.mxu0 0.0
      %2122 = vmatprep.subr.mxu0 0.0
      %2123 = vmatpush1.msra.mxu0 0.0
      %2124 = vmatprep.subr.mxu0 0.0
      %2125 = vmatpush1.msra.mxu0 0.0
      %2126 = vmatprep.subr.mxu0 0.0
      %2127 = vmatpush1.msra.mxu0 0.0
      %2128 = vmatprep.subr.mxu0 0.0
      %2129 = vmatpush1.msra.mxu0 0.0
      %2130 = vmatprep.subr.mxu0 0.0
      %2131 = vmatpush1.msra.mxu0 0.0
      %2132 = vmatprep.subr.mxu0 0.0
      %2133 = vmatpush1.msra.mxu0 0.0
      %2134 = vmatprep.subr.mxu0 0.0
      %2135 = vmatpush1.msra.mxu0 0.0
      %2136 = vmatprep.subr.mxu0 0.0
      %2137 = vmatpush1.msra.mxu0 0.0
      %2138 = vmatprep.subr.mxu0 0.0
      %2139 = vmatpush1.msra.mxu0 0.0
      %2140 = vmatprep.subr.mxu0 0.0
      %2141 = vmatpush1.msra.mxu0 %v2110
      %2142 = vmatprep.subr.mxu0 0.0
      %2143 = vmatpush1.msra.mxu0 %v2010
      %2144 = vmatprep.subr.mxu0 0.0
      %2145 = vmatpush2.msra.mxu0 0.0
      %2146 = vmatprep.subr.mxu0 0.0
      %2147 = vmatpush2.msra.mxu0 0.0
      %2148 = vmatprep.subr.mxu0 0.0
      %2149 = vmatpush2.msra.mxu0 0.0
      %2150 = vmatprep.subr.mxu0 0.0
      %2151 = vmatpush2.msra.mxu0 0.0
      %2152 = vmatprep.subr.mxu0 0.0
      %2153 = vmatpush2.msra.mxu0 0.0
      %2154 = vmatprep.subr.mxu0 0.0
      %2155 = vmatpush2.msra.mxu0 0.0
      %2156 = vmatprep.subr.mxu0 0.0
      %2157 = vmatpush2.msra.mxu0 0.0
      %2158 = vmatprep.subr.mxu0 0.0
      %2159 = vmatpush2.msra.mxu0 0.0
      %2160 = vmatprep.subr.mxu0 0.0
      %2161 = vmatpush2.msra.mxu0 0.0
      %2162 = vmatprep.subr.mxu0 0.0
      %2163 = vmatpush2.msra.mxu0 0.0
      %2164 = vmatprep.subr.mxu0 0.0
      %2165 = vmatpush2.msra.mxu0 0.0
      %2166 = vmatprep.subr.mxu0 0.0
      %2167 = vmatpush2.msra.mxu0 0.0
      %2168 = vmatprep.subr.mxu0 0.0
      %2169 = vmatpush2.msra.mxu0 0.0
      %2170 = vmatprep.subr.mxu0 0.0
      %2171 = vmatpush2.msra.mxu0 0.0
      %2172 = vmatprep.subr.mxu0 0.0
      %2173 = vmatpush2.msra.mxu0 0.0
      %2174 = vmatprep.subr.mxu0 0.0
      %2175 = vmatpush2.msra.mxu0 0.0
      %2176 = vmatprep.mubr.f32.mxu0 0.0
      %2177 = vmatmul.mubr.f32.gmra.mxu0 %v2107
      %v2178 = vpop.f32.mrf.mxu0
      %v2179 = vadd.f32 0.0, %v2178
      %v2180 = vpop.f32.mrf.mxu0
      %2181 = vdwg.mxu0
      %v2182 = vrcp.pop %v2105
      %v2183 = vmul.f32 %v2179, %v2182
      %2185 = vrot.lane.b32.xlu0 %v1331, 8
      %v2186 = vpop.permute.xlu0 %2185
      %2189 = vrot.lane.b32.xlu0 %v1757, 16
      %v2190 = vpop.permute.xlu0 %2189
      %2193 = vrot.lane.b32.xlu0 %v2183, 24
      %v2194 = vpop.permute.xlu0 %2193
      %v2196 = vsel %vm737, %v905, %v2186
      %vm2197 = vcmask 130048
      %v2198 = vsel %vm2197, %v2196, %v2190
      %vm2199 = vcmask 195584
      %v2200 = vsel %vm2199, %v2198, %v2194
      %v2201 = vld [vmem:[%s6] sm:$0xff]
      %v2202 = vld [vmem:[%s6 + $0x8] sm:$0xff]
      %v2203 = vld [vmem:[%s6 + $0x10] sm:$0xff]
      %v2204 = vld [vmem:[%s6 + $0x18] sm:$0xff]
      %v2205 = vld [vmem:[%s7] sm:$0x1]
      %v2207 = vlaneseq
      %v2208 = vshrl.u32 %v2207, 7
      %v2209 = vsub.s32 0, %v2208
      %v2210 = vrot.slane %v2205, %v2209
      %v2213 = vsel %vm471, %v2200, 0
      %v2216 = vsel %vm471, %v2201, 0
      %v2219 = vsel %vm471, %v2202, 0
      %v2222 = vsel %vm471, %v2203, 0
      %v2225 = vsel %vm471, %v2204, 0
      %2227 = vmatprep.subr.mxu0 0.0
      %2228 = vmatpush1.xpose.msra.mxu0 0.0
      %2229 = vmatprep.subr.mxu0 0.0
      %2230 = vmatpush1.xpose.msra.mxu0 0.0
      %2231 = vmatprep.subr.mxu0 0.0
      %2232 = vmatpush1.xpose.msra.mxu0 0.0
      %2233 = vmatprep.subr.mxu0 0.0
      %2234 = vmatpush1.xpose.msra.mxu0 0.0
      %2235 = vmatprep.subr.mxu0 0.0
      %2236 = vmatpush1.xpose.msra.mxu0 0.0
      %2237 = vmatprep.subr.mxu0 0.0
      %2238 = vmatpush1.xpose.msra.mxu0 0.0
      %2239 = vmatprep.subr.mxu0 0.0
      %2240 = vmatpush1.xpose.msra.mxu0 0.0
      %2241 = vmatprep.subr.mxu0 0.0
      %2242 = vmatpush1.xpose.msra.mxu0 0.0
      %2243 = vmatprep.subr.mxu0 0.0
      %2244 = vmatpush1.xpose.msra.mxu0 0.0
      %2245 = vmatprep.subr.mxu0 0.0
      %2246 = vmatpush1.xpose.msra.mxu0 0.0
      %2247 = vmatprep.subr.mxu0 0.0
      %2248 = vmatpush1.xpose.msra.mxu0 0.0
      %2249 = vmatprep.subr.mxu0 0.0
      %2250 = vmatpush1.xpose.msra.mxu0 0.0
      %2251 = vmatprep.subr.mxu0 0.0
      %2252 = vmatpush1.xpose.msra.mxu0 %v2225
      %2253 = vmatprep.subr.mxu0 0.0
      %2254 = vmatpush1.xpose.msra.mxu0 %v2222
      %2255 = vmatprep.subr.mxu0 0.0
      %2256 = vmatpush1.xpose.msra.mxu0 %v2219
      %2257 = vmatprep.subr.mxu0 0.0
      %2258 = vmatpush1.xpose.msra.mxu0 %v2216
      %2259 = vmatprep.subr.mxu0 0.0
      %2260 = vmatpush2.xpose.msra.mxu0 0.0
      %2261 = vmatprep.subr.mxu0 0.0
      %2262 = vmatpush2.xpose.msra.mxu0 0.0
      %2263 = vmatprep.subr.mxu0 0.0
      %2264 = vmatpush2.xpose.msra.mxu0 0.0
      %2265 = vmatprep.subr.mxu0 0.0
      %2266 = vmatpush2.xpose.msra.mxu0 0.0
      %2267 = vmatprep.subr.mxu0 0.0
      %2268 = vmatpush2.xpose.msra.mxu0 0.0
      %2269 = vmatprep.subr.mxu0 0.0
      %2270 = vmatpush2.xpose.msra.mxu0 0.0
      %2271 = vmatprep.subr.mxu0 0.0
      %2272 = vmatpush2.xpose.msra.mxu0 0.0
      %2273 = vmatprep.subr.mxu0 0.0
      %2274 = vmatpush2.xpose.msra.mxu0 0.0
      %2275 = vmatprep.subr.mxu0 0.0
      %2276 = vmatpush2.xpose.msra.mxu0 0.0
      %2277 = vmatprep.subr.mxu0 0.0
      %2278 = vmatpush2.xpose.msra.mxu0 0.0
      %2279 = vmatprep.subr.mxu0 0.0
      %2280 = vmatpush2.xpose.msra.mxu0 0.0
      %2281 = vmatprep.subr.mxu0 0.0
      %2282 = vmatpush2.xpose.msra.mxu0 0.0
      %2283 = vmatprep.subr.mxu0 0.0
      %2284 = vmatpush2.xpose.msra.mxu0 0.0
      %2285 = vmatprep.subr.mxu0 0.0
      %2286 = vmatpush2.xpose.msra.mxu0 0.0
      %2287 = vmatprep.subr.mxu0 0.0
      %2288 = vmatpush2.xpose.msra.mxu0 0.0
      %2289 = vmatprep.subr.mxu0 0.0
      %2290 = vmatpush2.xpose.msra.mxu0 0.0
      %2291 = vmatprep.mubr.f32.mxu0 0.0
      %2292 = vmatmul.mubr.f32.gmra.mxu0 %v2213
      %v2293 = vpop.f32.mrf.mxu0
      %v2294 = vadd.f32 %v2210, %v2293
      %v2295 = vpop.f32.mrf.mxu0
      %2296 = vdwg.mxu0
      %v2297 = vadd.f32 %v454, %v2294
      %v2298 = vsel %vm471, %v2297, 0.0
      %2299 = vadd.xlane.f32.xlu0 %v2298
      %v2300 = vpop.xlane.xlu0 %2299
      %v2301 = vrcp.pop 32.0
      %v2302 = vmul.f32 %v2300, %v2301
      %v2303 = vsub.f32 %v2297, %v2302
      %v2304 = vmul.f32 %v2303, %v2303
      %v2305 = vsel %vm471, %v2304, 0.0
      %2306 = vadd.xlane.f32.xlu0 %v2305
      %v2307 = vpop.xlane.xlu0 %2306
      %v2308 = vmul.f32 %v2307, %v2301
      %v2309 = vadd.f32 %v2308, 1e-05
      %v2310 = vrsqrt.pop %v2309
      %v2311 = vmul.f32 %v2303, %v2310
      %v2312 = vld [vmem:[%s8] sm:$0x1]
      %v2314 = vlaneseq
      %v2315 = vshrl.u32 %v2314, 7
      %v2316 = vsub.s32 0, %v2315
      %v2317 = vrot.slane %v2312, %v2316
      %v2319 = vmul.f32 %v2311, %v2317
      %v2320 = vld [vmem:[%s9] sm:$0x1]
      %v2322 = vlaneseq
      %v2323 = vshrl.u32 %v2322, 7
      %v2324 = vsub.s32 0, %v2323
      %v2325 = vrot.slane %v2320, %v2324
      %v2327 = vadd.f32 %v2319, %v2325
      %2328 = vst.msk [vmem:[%s453] sm:$0xff] %vm471, %v2327
      %p2329 = scmp.lt.s32.totalorder %s25, 1
      %s2330 = scalar_select %p2329, %s25, 1
      %p2331 = scmp.lt.s32.totalorder %s26, 0
      %s2332 = scalar_select %p2331, %s26, 0
      %s2333 = sadd.s32 %s2332, %s2330
      %s2334 = smul.addr %s2333, 8
      %s2335 = scalar_lea.vmem %s10, %s2334
      // Predicated region
      $region61: #{cross_attention_layer_forward.1} parent=59 // pred_check
        %p2336 = pneg %p287
      $region62: #{cross_attention_layer_forward.1} parent=59 // pred_check_branch
        %2338 = sbr.rel (%p2336) target = $region64
      $region63: #{cross_attention_layer_forward.1} parent=59 // pred_region
        _
      $region64: #{cross_attention_layer_forward.1} parent=59 // pred_fallthru
        _
    $region60: #{cross_attention_layer_forward.1} parent=5 // pred_fallthru
      _
    %p2339 = scmp.le.s32.totalorder 2, %s16
    // Predicated region
    $region65: #{cross_attention_layer_forward.1} parent=5 // pred_check
      %p2340 = pneg %p2339
    $region66: #{cross_attention_layer_forward.1} parent=5 // pred_check_branch
      %2342 = sbr.rel (%p2340) target = $region68
    $region67: #{cross_attention_layer_forward.1} parent=5 // pred_region
      %s2343 = ssub.s32 %s16, 2
      // Predicated region
      $region69: #{cross_attention_layer_forward.1} parent=67 // pred_check
        %p2344 = pneg %p293
      $region70: #{cross_attention_layer_forward.1} parent=67 // pred_check_branch
        %2346 = sbr.rel (%p2344) target = $region72
      $region71: #{cross_attention_layer_forward.1} parent=67 // pred_region
        %p2347 = scmp.lt.s32.totalorder %s27, 1
        %s2348 = scalar_select %p2347, %s27, 1
        %p2349 = scmp.lt.s32.totalorder %s28, 0
        %s2350 = scalar_select %p2349, %s28, 0
        %s2351 = sadd.s32 %s2350, %s2348
        %s2352 = smul.addr %s2351, 8
        %s2353 = scalar_lea.vmem %s10, %s2352
      $region72: #{cross_attention_layer_forward.1} parent=67 // pred_fallthru
        _
    $region68: #{cross_attention_layer_forward.1} parent=5 // pred_fallthru
      _
  $region6: #{cross_attention_layer_forward.1} parent=0 // loop_footer
    %s20 = sadd.s32 1, %s16
  $region7: #{cross_attention_layer_forward.1} parent=0 // loop_footer_branch
    %15 = sbr.rel target = $region3
  $region8: #{cross_attention_layer_forward.1} parent=0 // loop_exit
    _

</llo_original>
